<compile_context>
chip_gen: v7x
topology: tpu7x:2x2x1
jax: 0.10.0
libtpu: 0.0.40
codegen_flags: <defaults>
</compile_context>

<pallas_src>
import jax
import jax.numpy as jnp
from jax import lax
from jax.experimental import pallas as pl
from jax.experimental.pallas import tpu as pltpu


# --------------------------- fused conv(3x3, dw) + avgpool kernel --------------------------- #
def _make_token_init_kernel(H, W, c_blk, b_blk, Ho, Wo, ksize, stride):
    inv = 1.0 / float(ksize * ksize)

    def kernel(x_ref, w_ref, b_ref, o_ref):
        # x_ref: (b_blk, c_blk, H*W) NCHW-flattened block   w_ref: (9, c_blk)   b_ref: (1, c_blk)
        # o_ref: (b_blk, Ho, Wo, c_blk) channels-last pooled output (lane-dense for c_blk >= 128)
        w = w_ref[...].astype(jnp.float32)                       # tap-major depthwise weights
        bias = b_ref[...].astype(jnp.float32).reshape(1, 1, c_blk)

        # W-edge masks for the +-1 column shifts (hoisted: computed once per grid step)
        wcol = lax.broadcasted_iota(jnp.int32, (H + 2, W, c_blk), 1)
        has_left = wcol > 0                                      # column w-1 exists
        has_right = wcol < (W - 1)                               # column w+1 exists
        zrow = jnp.zeros((1, W, c_blk), jnp.float32)

        for bi in range(b_blk):
            # ---- relayout to channels-last entirely in VMEM (one 2-D transpose, XLU slot) ----
            xr = x_ref[bi]                                       # (c_blk, H*W), input dtype
            x = jnp.transpose(xr, (1, 0)).reshape(H, W, c_blk).astype(jnp.float32)

            # zero halo of the conv along H only (slab axis -> cheap concat of one zero row)
            xp = jnp.concatenate([zrow, x, zrow], axis=0)        # (H+2, W, c_blk)

            # ---- depthwise 3x3 conv = 9 shifted VPU multiply-accumulates ----
            acc = None
            for kj in range(3):                                  # column shift: left / none / right
                if kj == 0:
                    s = jnp.where(has_left, pltpu.roll(xp, shift=1, axis=1), 0.0)
                elif kj == 1:
                    s = xp
                else:
                    s = jnp.where(has_right, pltpu.roll(xp, shift=W - 1, axis=1), 0.0)
                for ki in range(3):                              # row shift: free slab slice
                    t = ki * 3 + kj
                    wt = w[t:t + 1, :].reshape(1, 1, c_blk)      # per-channel tap weight
                    contrib = s[ki:ki + H] * wt                  # (H, W, c_blk)
                    acc = contrib if acc is None else acc + contrib

            # ---- average pooling (kernel=ksize, stride=stride, VALID) ----
            if ksize == stride:                                  # standard FasterViT config
                rp = acc[:Ho * ksize].reshape(Ho, ksize, W, c_blk).sum(axis=1)   # free slab split
            else:                                                # general fallback (slab slices)
                rp = jnp.concatenate(
                    [acc[p * stride:p * stride + ksize].sum(axis=0, keepdims=True)
                     for p in range(Ho)], axis=0)                # (Ho, W, c_blk)
            # W pooling on the ksize-times-smaller row-pooled array (tiny sublane slices)
            cols = [rp[:, q * stride:q * stride + ksize, :].sum(axis=1, keepdims=True)
                    for q in range(Wo)]
            a = jnp.concatenate(cols, axis=1)                    # (Ho, Wo, c_blk)

            # avg(conv) + bias == avg(conv + bias) since bias is constant over the pool window
            o_ref[bi] = (a * inv + bias).astype(o_ref.dtype)

    return kernel


# ----------------------------------- TokenInitializer.forward ------------------------------- #
def token_initializer_forward(x_nchw, dw_weight, dw_bias, *,
                              input_resolution, window_size, ct_size=1):
    """x_nchw: (B, C, H, W); dw_weight: (C, 1, 3, 3); dw_bias: (C,). Returns (B, Ho*Wo, C)."""
    B, C, H, W = x_nchw.shape
    output_size = int(ct_size * input_resolution / window_size)
    stride = int(input_resolution / output_size)
    ksize = input_resolution - (output_size - 1) * stride
    # validate the derived pooling config against the actual spatial dims
    assert H == input_resolution and W == input_resolution, (H, W, input_resolution)
    assert output_size >= 1 and stride >= 1 and 1 <= ksize <= min(H, W), (output_size, stride, ksize)
    Ho = (H - ksize) // stride + 1
    Wo = (W - ksize) // stride + 1
    assert Ho % ct_size == 0 and Wo % ct_size == 0, (Ho, Wo, ct_size)

    in_bytes = jnp.dtype(x_nchw.dtype).itemsize

    # channel-block (lane) tiling: biggest lane-aligned block whose in-kernel working set
    # (~8 f32 copies of the tile + double-buffered input) stays inside a VMEM budget that is
    # safe on v7x (64 MiB physical) while still using big blocks on v5e/v6e (128 MiB).
    budget = 16 * 1024 * 1024
    per_chan = H * W * (8 * 4 + 2 * in_bytes)
    if C <= 128 or C % 128 != 0:
        c_blk = C
    else:
        c_blk = min(C, max(128, (budget // per_chan) // 128 * 128))
        while C % c_blk != 0:
            c_blk -= 128
    n_cblk = C // c_blk

    # fold several batch images into one grid step when blocks are small (amortizes the
    # ~0.35us/step overhead and enlarges the DMAs / output stores).
    per_img = c_blk * per_chan
    b_blk = 1
    for d in range(1, min(B, 8) + 1):
        if B % d == 0 and d * per_img <= budget:
            b_blk = d

    # depthwise weight (C, 1, 3, 3) -> (9, C), tap index t = ki*3 + kj; tiny, keep f32
    w9 = jnp.transpose(dw_weight.reshape(C, 9), (1, 0)).astype(jnp.float32)
    b2 = dw_bias.reshape(1, C).astype(jnp.float32)

    # free metadata reshape: NCHW -> (B, C, H*W), so the in-kernel relayout is a plain 2-D transpose
    x2 = x_nchw.reshape(B, C, H * W)

    kernel = _make_token_init_kernel(H, W, c_blk, b_blk, Ho, Wo, ksize, stride)
    pooled = pl.pallas_call(
        kernel,
        out_shape=jax.ShapeDtypeStruct((B, Ho, Wo, C), x_nchw.dtype),
        grid=(B // b_blk, n_cblk),
        in_specs=[
            pl.BlockSpec((b_blk, c_blk, H * W), lambda b, c: (b, c, 0)),
            pl.BlockSpec((9, c_blk), lambda b, c: (0, c)),
            pl.BlockSpec((1, c_blk), lambda b, c: (0, c)),
        ],
        out_specs=pl.BlockSpec((b_blk, Ho, Wo, c_blk), lambda b, c: (b, 0, 0, c)),
        compiler_params=pltpu.CompilerParams(
            # TODO(synk): use pltpu.CORE_PARALLEL on the leading axis for v7x (2 TC/chip).
            dimension_semantics=("parallel", "parallel"),
            vmem_limit_bytes=48 * 1024 * 1024,
        ),
    )(x2, w9, b2)

    # carrier-token window regrouping: pure index shuffling on the tiny pooled tensor (XLA glue)
    cts = ct_size
    ct = pooled.reshape(B, Ho // cts, cts, Wo // cts, cts, C)
    ct = jnp.transpose(ct, (0, 1, 3, 2, 4, 5)).reshape(B, Ho * Wo, C)
    return ct


# --------------------------------------- pure-JAX reference --------------------------------- #
def reference_forward(x_nchw, dw_weight, dw_bias, *, input_resolution, window_size, ct_size=1):
    B, C, H, W = x_nchw.shape
    output_size = int(ct_size * input_resolution / window_size)
    stride = int(input_resolution / output_size)
    ksize = input_resolution - (output_size - 1) * stride
    conv = lax.conv_general_dilated(
        x_nchw, dw_weight, window_strides=(1, 1), padding=((1, 1), (1, 1)),
        dimension_numbers=("NCHW", "OIHW", "NCHW"),
        feature_group_count=C, precision=lax.Precision.HIGHEST)
    conv = conv + dw_bias[None, :, None, None]
    pooled = lax.reduce_window(conv, jnp.array(0.0, conv.dtype), lax.add,
                               window_dimensions=(1, 1, ksize, ksize),
                               window_strides=(1, 1, stride, stride),
                               padding="VALID") / float(ksize * ksize)
    Bp, Cp, Hp, Wp = pooled.shape
    ct = pooled.reshape(Bp, Cp, Hp // ct_size, ct_size, Wp // ct_size, ct_size)
    ct = jnp.transpose(ct, (0, 2, 4, 3, 5, 1)).reshape(-1, Hp * Wp, Cp)
    return ct


if __name__ == "__main__":
    key = jax.random.PRNGKey(0)
    k1, k2, k3 = jax.random.split(key, 3)

    B, dim = 2, 4
    input_resolution, window_size, ct_size = 16, 8, 2   # -> pool kernel=stride=4, 4x4 pooled grid

    x = jax.random.normal(k1, (B, dim, input_resolution, input_resolution), jnp.float32)
    dw_weight = 0.3 * jax.random.normal(k2, (dim, 1, 3, 3), jnp.float32)   # pos_embed.weight (groups=dim)
    dw_bias = 0.1 * jax.random.normal(k3, (dim,), jnp.float32)             # pos_embed.bias

    out = jax.block_until_ready(
        token_initializer_forward(x, dw_weight, dw_bias,
                                  input_resolution=input_resolution,
                                  window_size=window_size, ct_size=ct_size))
    ref = reference_forward(x, dw_weight, dw_bias,
                            input_resolution=input_resolution,
                            window_size=window_size, ct_size=ct_size)

    output_size = int(ct_size * input_resolution / window_size)
    assert out.shape == (B, output_size * output_size, dim), out.shape
    max_err = float(jnp.max(jnp.abs(out - ref)))
    assert max_err < 1e-3, f"max abs error too large: {max_err}"

    # bf16 inputs are accepted without a wrapper upcast (accumulation stays f32 in-kernel)
    out_bf16 = jax.block_until_ready(
        token_initializer_forward(x.astype(jnp.bfloat16), dw_weight, dw_bias,
                                  input_resolution=input_resolution,
                                  window_size=window_size, ct_size=ct_size))
    max_err_bf16 = float(jnp.max(jnp.abs(out_bf16.astype(jnp.float32) - ref)))
    assert max_err_bf16 < 1e-1, f"bf16 max abs error too large: {max_err_bf16}"

    print("KERNEL_OK")
</pallas_src>

<mosaic_0001>
module attributes {stable_mosaic.version = 11 : i64} {
  func.func @kernel(%arg0: i32, %arg1: i32, %arg2: memref<2x4x256xf32, #tpu.memory_space<vmem>>, %arg3: memref<9x4xf32, #tpu.memory_space<vmem>>, %arg4: memref<1x4xf32, #tpu.memory_space<vmem>>, %arg5: memref<2x4x4x4xf32, #tpu.memory_space<vmem>>) attributes {dimension_semantics = [#tpu.dimension_semantics<parallel>, #tpu.dimension_semantics<parallel>], iteration_bounds = array<i64: 1, 1>, scalar_prefetch = 0 : i64, scratch_operands = 0 : i64, tpu.core_type = #tpu.core_type<tc>, window_params = [{transform_indices = @transform_0, window_bounds = array<i64: 2, 4, 256>}, {transform_indices = @transform_1, window_bounds = array<i64: 9, 4>}, {transform_indices = @transform_2, window_bounds = array<i64: 1, 4>}, {transform_indices = @transform_3, window_bounds = array<i64: 2, 4, 4, 4>}]} {
    %c0 = arith.constant 0 : index
    %c0_0 = arith.constant 0 : index
    %0 = vector.load %arg3[%c0, %c0_0] : memref<9x4xf32, #tpu.memory_space<vmem>>, vector<9x4xf32>
    %c0_1 = arith.constant 0 : index
    %c0_2 = arith.constant 0 : index
    %1 = vector.load %arg4[%c0_1, %c0_2] : memref<1x4xf32, #tpu.memory_space<vmem>>, vector<1x4xf32>
    %2 = vector.shape_cast %1 : vector<1x4xf32> to vector<1x1x4xf32>
    %3 = tpu.iota {dimensions = array<i32: 1>} : vector<18x16x4xi32>
    %c0_i32 = arith.constant 0 : i32
    %4 = vector.broadcast %c0_i32 : i32 to vector<18x16x4xi32>
    %5 = arith.cmpi sgt, %3, %4 : vector<18x16x4xi32>
    %c15_i32 = arith.constant 15 : i32
    %6 = vector.broadcast %c15_i32 : i32 to vector<18x16x4xi32>
    %7 = arith.cmpi slt, %3, %6 : vector<18x16x4xi32>
    %cst = arith.constant 0.000000e+00 : f32
    %8 = vector.broadcast %cst : f32 to vector<1x16x4xf32>
    %c0_3 = arith.constant 0 : index
    %c0_4 = arith.constant 0 : index
    %c0_5 = arith.constant 0 : index
    %9 = vector.load %arg2[%c0_3, %c0_4, %c0_5] : memref<2x4x256xf32, #tpu.memory_space<vmem>>, vector<1x4x256xf32>
    %10 = vector.shape_cast %9 : vector<1x4x256xf32> to vector<4x256xf32>
    %11 = tpu.transpose %10, [1, 0] : vector<4x256xf32> -> vector<256x4xf32>
    %12 = vector.shape_cast %11 : vector<256x4xf32> to vector<16x16x4xf32>
    %13 = tpu.concatenate %8, %12, %8 in 0 : vector<1x16x4xf32>, vector<16x16x4xf32>, vector<1x16x4xf32> -> vector<18x16x4xf32>
    %c1_i32 = arith.constant 1 : i32
    %14 = tpu.dynamic_rotate %13 by %c1_i32 dim 1 : vector<18x16x4xf32>, i32 -> vector<18x16x4xf32>
    %cst_6 = arith.constant 0.000000e+00 : f32
    %15 = vector.broadcast %cst_6 : f32 to vector<18x16x4xf32>
    %16 = arith.select %5, %14, %15 : vector<18x16x4xi1>, vector<18x16x4xf32>
    %17 = vector.extract_strided_slice %0 {offsets = [0, 0], sizes = [1, 4], strides = [1, 1]} : vector<9x4xf32> to vector<1x4xf32>
    %18 = vector.shape_cast %17 : vector<1x4xf32> to vector<1x1x4xf32>
    %19 = vector.extract_strided_slice %16 {offsets = [0, 0, 0], sizes = [16, 16, 4], strides = [1, 1, 1]} : vector<18x16x4xf32> to vector<16x16x4xf32>
    %20 = vector.broadcast %18 : vector<1x1x4xf32> to vector<16x16x4xf32>
    %21 = arith.mulf %19, %20 : vector<16x16x4xf32>
    %22 = vector.extract_strided_slice %0 {offsets = [3, 0], sizes = [1, 4], strides = [1, 1]} : vector<9x4xf32> to vector<1x4xf32>
    %23 = vector.shape_cast %22 : vector<1x4xf32> to vector<1x1x4xf32>
    %24 = vector.extract_strided_slice %16 {offsets = [1, 0, 0], sizes = [16, 16, 4], strides = [1, 1, 1]} : vector<18x16x4xf32> to vector<16x16x4xf32>
    %25 = vector.broadcast %23 : vector<1x1x4xf32> to vector<16x16x4xf32>
    %26 = arith.mulf %24, %25 : vector<16x16x4xf32>
    %27 = arith.addf %21, %26 : vector<16x16x4xf32>
    %28 = vector.extract_strided_slice %0 {offsets = [6, 0], sizes = [1, 4], strides = [1, 1]} : vector<9x4xf32> to vector<1x4xf32>
    %29 = vector.shape_cast %28 : vector<1x4xf32> to vector<1x1x4xf32>
    %30 = vector.extract_strided_slice %16 {offsets = [2, 0, 0], sizes = [16, 16, 4], strides = [1, 1, 1]} : vector<18x16x4xf32> to vector<16x16x4xf32>
    %31 = vector.broadcast %29 : vector<1x1x4xf32> to vector<16x16x4xf32>
    %32 = arith.mulf %30, %31 : vector<16x16x4xf32>
    %33 = arith.addf %27, %32 : vector<16x16x4xf32>
    %34 = vector.extract_strided_slice %0 {offsets = [1, 0], sizes = [1, 4], strides = [1, 1]} : vector<9x4xf32> to vector<1x4xf32>
    %35 = vector.shape_cast %34 : vector<1x4xf32> to vector<1x1x4xf32>
    %36 = vector.extract_strided_slice %13 {offsets = [0, 0, 0], sizes = [16, 16, 4], strides = [1, 1, 1]} : vector<18x16x4xf32> to vector<16x16x4xf32>
    %37 = vector.broadcast %35 : vector<1x1x4xf32> to vector<16x16x4xf32>
    %38 = arith.mulf %36, %37 : vector<16x16x4xf32>
    %39 = arith.addf %33, %38 : vector<16x16x4xf32>
    %40 = vector.extract_strided_slice %0 {offsets = [4, 0], sizes = [1, 4], strides = [1, 1]} : vector<9x4xf32> to vector<1x4xf32>
    %41 = vector.shape_cast %40 : vector<1x4xf32> to vector<1x1x4xf32>
    %42 = vector.extract_strided_slice %13 {offsets = [1, 0, 0], sizes = [16, 16, 4], strides = [1, 1, 1]} : vector<18x16x4xf32> to vector<16x16x4xf32>
    %43 = vector.broadcast %41 : vector<1x1x4xf32> to vector<16x16x4xf32>
    %44 = arith.mulf %42, %43 : vector<16x16x4xf32>
    %45 = arith.addf %39, %44 : vector<16x16x4xf32>
    %46 = vector.extract_strided_slice %0 {offsets = [7, 0], sizes = [1, 4], strides = [1, 1]} : vector<9x4xf32> to vector<1x4xf32>
    %47 = vector.shape_cast %46 : vector<1x4xf32> to vector<1x1x4xf32>
    %48 = vector.extract_strided_slice %13 {offsets = [2, 0, 0], sizes = [16, 16, 4], strides = [1, 1, 1]} : vector<18x16x4xf32> to vector<16x16x4xf32>
    %49 = vector.broadcast %47 : vector<1x1x4xf32> to vector<16x16x4xf32>
    %50 = arith.mulf %48, %49 : vector<16x16x4xf32>
    %51 = arith.addf %45, %50 : vector<16x16x4xf32>
    %c15_i32_7 = arith.constant 15 : i32
    %52 = tpu.dynamic_rotate %13 by %c15_i32_7 dim 1 : vector<18x16x4xf32>, i32 -> vector<18x16x4xf32>
    %cst_8 = arith.constant 0.000000e+00 : f32
    %53 = vector.broadcast %cst_8 : f32 to vector<18x16x4xf32>
    %54 = arith.select %7, %52, %53 : vector<18x16x4xi1>, vector<18x16x4xf32>
    %55 = vector.extract_strided_slice %0 {offsets = [2, 0], sizes = [1, 4], strides = [1, 1]} : vector<9x4xf32> to vector<1x4xf32>
    %56 = vector.shape_cast %55 : vector<1x4xf32> to vector<1x1x4xf32>
    %57 = vector.extract_strided_slice %54 {offsets = [0, 0, 0], sizes = [16, 16, 4], strides = [1, 1, 1]} : vector<18x16x4xf32> to vector<16x16x4xf32>
    %58 = vector.broadcast %56 : vector<1x1x4xf32> to vector<16x16x4xf32>
    %59 = arith.mulf %57, %58 : vector<16x16x4xf32>
    %60 = arith.addf %51, %59 : vector<16x16x4xf32>
    %61 = vector.extract_strided_slice %0 {offsets = [5, 0], sizes = [1, 4], strides = [1, 1]} : vector<9x4xf32> to vector<1x4xf32>
    %62 = vector.shape_cast %61 : vector<1x4xf32> to vector<1x1x4xf32>
    %63 = vector.extract_strided_slice %54 {offsets = [1, 0, 0], sizes = [16, 16, 4], strides = [1, 1, 1]} : vector<18x16x4xf32> to vector<16x16x4xf32>
    %64 = vector.broadcast %62 : vector<1x1x4xf32> to vector<16x16x4xf32>
    %65 = arith.mulf %63, %64 : vector<16x16x4xf32>
    %66 = arith.addf %60, %65 : vector<16x16x4xf32>
    %67 = vector.extract_strided_slice %0 {offsets = [8, 0], sizes = [1, 4], strides = [1, 1]} : vector<9x4xf32> to vector<1x4xf32>
    %68 = vector.shape_cast %67 : vector<1x4xf32> to vector<1x1x4xf32>
    %69 = vector.extract_strided_slice %54 {offsets = [2, 0, 0], sizes = [16, 16, 4], strides = [1, 1, 1]} : vector<18x16x4xf32> to vector<16x16x4xf32>
    %70 = vector.broadcast %68 : vector<1x1x4xf32> to vector<16x16x4xf32>
    %71 = arith.mulf %69, %70 : vector<16x16x4xf32>
    %72 = arith.addf %66, %71 : vector<16x16x4xf32>
    %73 = vector.shape_cast %72 : vector<16x16x4xf32> to vector<4x4x16x4xf32>
    %cst_9 = arith.constant dense<0.000000e+00> : vector<4x16x4xf32>
    %74 = vector.multi_reduction <add>, %73, %cst_9 [1] : vector<4x4x16x4xf32> to vector<4x16x4xf32>
    %75 = vector.extract_strided_slice %74 {offsets = [0, 0, 0], sizes = [4, 4, 4], strides = [1, 1, 1]} : vector<4x16x4xf32> to vector<4x4x4xf32>
    %cst_10 = arith.constant dense<0.000000e+00> : vector<4x4xf32>
    %76 = vector.multi_reduction <add>, %75, %cst_10 [1] : vector<4x4x4xf32> to vector<4x4xf32>
    %77 = vector.shape_cast %76 : vector<4x4xf32> to vector<4x1x4xf32>
    %78 = vector.extract_strided_slice %74 {offsets = [0, 4, 0], sizes = [4, 4, 4], strides = [1, 1, 1]} : vector<4x16x4xf32> to vector<4x4x4xf32>
    %cst_11 = arith.constant dense<0.000000e+00> : vector<4x4xf32>
    %79 = vector.multi_reduction <add>, %78, %cst_11 [1] : vector<4x4x4xf32> to vector<4x4xf32>
    %80 = vector.shape_cast %79 : vector<4x4xf32> to vector<4x1x4xf32>
    %81 = vector.extract_strided_slice %74 {offsets = [0, 8, 0], sizes = [4, 4, 4], strides = [1, 1, 1]} : vector<4x16x4xf32> to vector<4x4x4xf32>
    %cst_12 = arith.constant dense<0.000000e+00> : vector<4x4xf32>
    %82 = vector.multi_reduction <add>, %81, %cst_12 [1] : vector<4x4x4xf32> to vector<4x4xf32>
    %83 = vector.shape_cast %82 : vector<4x4xf32> to vector<4x1x4xf32>
    %84 = vector.extract_strided_slice %74 {offsets = [0, 12, 0], sizes = [4, 4, 4], strides = [1, 1, 1]} : vector<4x16x4xf32> to vector<4x4x4xf32>
    %cst_13 = arith.constant dense<0.000000e+00> : vector<4x4xf32>
    %85 = vector.multi_reduction <add>, %84, %cst_13 [1] : vector<4x4x4xf32> to vector<4x4xf32>
    %86 = vector.shape_cast %85 : vector<4x4xf32> to vector<4x1x4xf32>
    %87 = tpu.concatenate %77, %80, %83, %86 in 1 : vector<4x1x4xf32>, vector<4x1x4xf32>, vector<4x1x4xf32>, vector<4x1x4xf32> -> vector<4x4x4xf32>
    %cst_14 = arith.constant 6.250000e-02 : f32
    %88 = vector.broadcast %cst_14 : f32 to vector<4x4x4xf32>
    %89 = arith.mulf %87, %88 : vector<4x4x4xf32>
    %90 = vector.broadcast %2 : vector<1x1x4xf32> to vector<4x4x4xf32>
    %91 = arith.addf %89, %90 : vector<4x4x4xf32>
    %c0_15 = arith.constant 0 : index
    %c0_16 = arith.constant 0 : index
    %c0_17 = arith.constant 0 : index
    %c0_18 = arith.constant 0 : index
    %92 = vector.load %arg5[%c0_15, %c0_16, %c0_17, %c0_18] : memref<2x4x4x4xf32, #tpu.memory_space<vmem>>, vector<1x4x4x4xf32>
    %93 = vector.shape_cast %92 : vector<1x4x4x4xf32> to vector<4x4x4xf32>
    %94 = vector.shape_cast %91 : vector<4x4x4xf32> to vector<1x4x4x4xf32>
    tpu.vector_store %arg5[%c0_15, %c0_16, %c0_17, %c0_18], %94 {strides = array<i32>} : memref<2x4x4x4xf32, #tpu.memory_space<vmem>>, vector<1x4x4x4xf32>,
    %c1 = arith.constant 1 : index
    %c0_19 = arith.constant 0 : index
    %c0_20 = arith.constant 0 : index
    %95 = vector.load %arg2[%c1, %c0_19, %c0_20] : memref<2x4x256xf32, #tpu.memory_space<vmem>>, vector<1x4x256xf32>
    %96 = vector.shape_cast %95 : vector<1x4x256xf32> to vector<4x256xf32>
    %97 = tpu.transpose %96, [1, 0] : vector<4x256xf32> -> vector<256x4xf32>
    %98 = vector.shape_cast %97 : vector<256x4xf32> to vector<16x16x4xf32>
    %99 = tpu.concatenate %8, %98, %8 in 0 : vector<1x16x4xf32>, vector<16x16x4xf32>, vector<1x16x4xf32> -> vector<18x16x4xf32>
    %c1_i32_21 = arith.constant 1 : i32
    %100 = tpu.dynamic_rotate %99 by %c1_i32_21 dim 1 : vector<18x16x4xf32>, i32 -> vector<18x16x4xf32>
    %cst_22 = arith.constant 0.000000e+00 : f32
    %101 = vector.broadcast %cst_22 : f32 to vector<18x16x4xf32>
    %102 = arith.select %5, %100, %101 : vector<18x16x4xi1>, vector<18x16x4xf32>
    %103 = vector.extract_strided_slice %0 {offsets = [0, 0], sizes = [1, 4], strides = [1, 1]} : vector<9x4xf32> to vector<1x4xf32>
    %104 = vector.shape_cast %103 : vector<1x4xf32> to vector<1x1x4xf32>
    %105 = vector.extract_strided_slice %102 {offsets = [0, 0, 0], sizes = [16, 16, 4], strides = [1, 1, 1]} : vector<18x16x4xf32> to vector<16x16x4xf32>
    %106 = vector.broadcast %104 : vector<1x1x4xf32> to vector<16x16x4xf32>
    %107 = arith.mulf %105, %106 : vector<16x16x4xf32>
    %108 = vector.extract_strided_slice %0 {offsets = [3, 0], sizes = [1, 4], strides = [1, 1]} : vector<9x4xf32> to vector<1x4xf32>
    %109 = vector.shape_cast %108 : vector<1x4xf32> to vector<1x1x4xf32>
    %110 = vector.extract_strided_slice %102 {offsets = [1, 0, 0], sizes = [16, 16, 4], strides = [1, 1, 1]} : vector<18x16x4xf32> to vector<16x16x4xf32>
    %111 = vector.broadcast %109 : vector<1x1x4xf32> to vector<16x16x4xf32>
    %112 = arith.mulf %110, %111 : vector<16x16x4xf32>
    %113 = arith.addf %107, %112 : vector<16x16x4xf32>
    %114 = vector.extract_strided_slice %0 {offsets = [6, 0], sizes = [1, 4], strides = [1, 1]} : vector<9x4xf32> to vector<1x4xf32>
    %115 = vector.shape_cast %114 : vector<1x4xf32> to vector<1x1x4xf32>
    %116 = vector.extract_strided_slice %102 {offsets = [2, 0, 0], sizes = [16, 16, 4], strides = [1, 1, 1]} : vector<18x16x4xf32> to vector<16x16x4xf32>
    %117 = vector.broadcast %115 : vector<1x1x4xf32> to vector<16x16x4xf32>
    %118 = arith.mulf %116, %117 : vector<16x16x4xf32>
    %119 = arith.addf %113, %118 : vector<16x16x4xf32>
    %120 = vector.extract_strided_slice %0 {offsets = [1, 0], sizes = [1, 4], strides = [1, 1]} : vector<9x4xf32> to vector<1x4xf32>
    %121 = vector.shape_cast %120 : vector<1x4xf32> to vector<1x1x4xf32>
    %122 = vector.extract_strided_slice %99 {offsets = [0, 0, 0], sizes = [16, 16, 4], strides = [1, 1, 1]} : vector<18x16x4xf32> to vector<16x16x4xf32>
    %123 = vector.broadcast %121 : vector<1x1x4xf32> to vector<16x16x4xf32>
    %124 = arith.mulf %122, %123 : vector<16x16x4xf32>
    %125 = arith.addf %119, %124 : vector<16x16x4xf32>
    %126 = vector.extract_strided_slice %0 {offsets = [4, 0], sizes = [1, 4], strides = [1, 1]} : vector<9x4xf32> to vector<1x4xf32>
    %127 = vector.shape_cast %126 : vector<1x4xf32> to vector<1x1x4xf32>
    %128 = vector.extract_strided_slice %99 {offsets = [1, 0, 0], sizes = [16, 16, 4], strides = [1, 1, 1]} : vector<18x16x4xf32> to vector<16x16x4xf32>
    %129 = vector.broadcast %127 : vector<1x1x4xf32> to vector<16x16x4xf32>
    %130 = arith.mulf %128, %129 : vector<16x16x4xf32>
    %131 = arith.addf %125, %130 : vector<16x16x4xf32>
    %132 = vector.extract_strided_slice %0 {offsets = [7, 0], sizes = [1, 4], strides = [1, 1]} : vector<9x4xf32> to vector<1x4xf32>
    %133 = vector.shape_cast %132 : vector<1x4xf32> to vector<1x1x4xf32>
    %134 = vector.extract_strided_slice %99 {offsets = [2, 0, 0], sizes = [16, 16, 4], strides = [1, 1, 1]} : vector<18x16x4xf32> to vector<16x16x4xf32>
    %135 = vector.broadcast %133 : vector<1x1x4xf32> to vector<16x16x4xf32>
    %136 = arith.mulf %134, %135 : vector<16x16x4xf32>
    %137 = arith.addf %131, %136 : vector<16x16x4xf32>
    %c15_i32_23 = arith.constant 15 : i32
    %138 = tpu.dynamic_rotate %99 by %c15_i32_23 dim 1 : vector<18x16x4xf32>, i32 -> vector<18x16x4xf32>
    %cst_24 = arith.constant 0.000000e+00 : f32
    %139 = vector.broadcast %cst_24 : f32 to vector<18x16x4xf32>
    %140 = arith.select %7, %138, %139 : vector<18x16x4xi1>, vector<18x16x4xf32>
    %141 = vector.extract_strided_slice %0 {offsets = [2, 0], sizes = [1, 4], strides = [1, 1]} : vector<9x4xf32> to vector<1x4xf32>
    %142 = vector.shape_cast %141 : vector<1x4xf32> to vector<1x1x4xf32>
    %143 = vector.extract_strided_slice %140 {offsets = [0, 0, 0], sizes = [16, 16, 4], strides = [1, 1, 1]} : vector<18x16x4xf32> to vector<16x16x4xf32>
    %144 = vector.broadcast %142 : vector<1x1x4xf32> to vector<16x16x4xf32>
    %145 = arith.mulf %143, %144 : vector<16x16x4xf32>
    %146 = arith.addf %137, %145 : vector<16x16x4xf32>
    %147 = vector.extract_strided_slice %0 {offsets = [5, 0], sizes = [1, 4], strides = [1, 1]} : vector<9x4xf32> to vector<1x4xf32>
    %148 = vector.shape_cast %147 : vector<1x4xf32> to vector<1x1x4xf32>
    %149 = vector.extract_strided_slice %140 {offsets = [1, 0, 0], sizes = [16, 16, 4], strides = [1, 1, 1]} : vector<18x16x4xf32> to vector<16x16x4xf32>
    %150 = vector.broadcast %148 : vector<1x1x4xf32> to vector<16x16x4xf32>
    %151 = arith.mulf %149, %150 : vector<16x16x4xf32>
    %152 = arith.addf %146, %151 : vector<16x16x4xf32>
    %153 = vector.extract_strided_slice %0 {offsets = [8, 0], sizes = [1, 4], strides = [1, 1]} : vector<9x4xf32> to vector<1x4xf32>
    %154 = vector.shape_cast %153 : vector<1x4xf32> to vector<1x1x4xf32>
    %155 = vector.extract_strided_slice %140 {offsets = [2, 0, 0], sizes = [16, 16, 4], strides = [1, 1, 1]} : vector<18x16x4xf32> to vector<16x16x4xf32>
    %156 = vector.broadcast %154 : vector<1x1x4xf32> to vector<16x16x4xf32>
    %157 = arith.mulf %155, %156 : vector<16x16x4xf32>
    %158 = arith.addf %152, %157 : vector<16x16x4xf32>
    %159 = vector.shape_cast %158 : vector<16x16x4xf32> to vector<4x4x16x4xf32>
    %cst_25 = arith.constant dense<0.000000e+00> : vector<4x16x4xf32>
    %160 = vector.multi_reduction <add>, %159, %cst_25 [1] : vector<4x4x16x4xf32> to vector<4x16x4xf32>
    %161 = vector.extract_strided_slice %160 {offsets = [0, 0, 0], sizes = [4, 4, 4], strides = [1, 1, 1]} : vector<4x16x4xf32> to vector<4x4x4xf32>
    %cst_26 = arith.constant dense<0.000000e+00> : vector<4x4xf32>
    %162 = vector.multi_reduction <add>, %161, %cst_26 [1] : vector<4x4x4xf32> to vector<4x4xf32>
    %163 = vector.shape_cast %162 : vector<4x4xf32> to vector<4x1x4xf32>
    %164 = vector.extract_strided_slice %160 {offsets = [0, 4, 0], sizes = [4, 4, 4], strides = [1, 1, 1]} : vector<4x16x4xf32> to vector<4x4x4xf32>
    %cst_27 = arith.constant dense<0.000000e+00> : vector<4x4xf32>
    %165 = vector.multi_reduction <add>, %164, %cst_27 [1] : vector<4x4x4xf32> to vector<4x4xf32>
    %166 = vector.shape_cast %165 : vector<4x4xf32> to vector<4x1x4xf32>
    %167 = vector.extract_strided_slice %160 {offsets = [0, 8, 0], sizes = [4, 4, 4], strides = [1, 1, 1]} : vector<4x16x4xf32> to vector<4x4x4xf32>
    %cst_28 = arith.constant dense<0.000000e+00> : vector<4x4xf32>
    %168 = vector.multi_reduction <add>, %167, %cst_28 [1] : vector<4x4x4xf32> to vector<4x4xf32>
    %169 = vector.shape_cast %168 : vector<4x4xf32> to vector<4x1x4xf32>
    %170 = vector.extract_strided_slice %160 {offsets = [0, 12, 0], sizes = [4, 4, 4], strides = [1, 1, 1]} : vector<4x16x4xf32> to vector<4x4x4xf32>
    %cst_29 = arith.constant dense<0.000000e+00> : vector<4x4xf32>
    %171 = vector.multi_reduction <add>, %170, %cst_29 [1] : vector<4x4x4xf32> to vector<4x4xf32>
    %172 = vector.shape_cast %171 : vector<4x4xf32> to vector<4x1x4xf32>
    %173 = tpu.concatenate %163, %166, %169, %172 in 1 : vector<4x1x4xf32>, vector<4x1x4xf32>, vector<4x1x4xf32>, vector<4x1x4xf32> -> vector<4x4x4xf32>
    %cst_30 = arith.constant 6.250000e-02 : f32
    %174 = vector.broadcast %cst_30 : f32 to vector<4x4x4xf32>
    %175 = arith.mulf %173, %174 : vector<4x4x4xf32>
    %176 = vector.broadcast %2 : vector<1x1x4xf32> to vector<4x4x4xf32>
    %177 = arith.addf %175, %176 : vector<4x4x4xf32>
    %c1_31 = arith.constant 1 : index
    %c0_32 = arith.constant 0 : index
    %c0_33 = arith.constant 0 : index
    %c0_34 = arith.constant 0 : index
    %178 = vector.load %arg5[%c1_31, %c0_32, %c0_33, %c0_34] : memref<2x4x4x4xf32, #tpu.memory_space<vmem>>, vector<1x4x4x4xf32>
    %179 = vector.shape_cast %178 : vector<1x4x4x4xf32> to vector<4x4x4xf32>
    %180 = vector.shape_cast %177 : vector<4x4x4xf32> to vector<1x4x4x4xf32>
    tpu.vector_store %arg5[%c1_31, %c0_32, %c0_33, %c0_34], %180 {strides = array<i32>} : memref<2x4x4x4xf32, #tpu.memory_space<vmem>>, vector<1x4x4x4xf32>,
    return
  }
  func.func @transform_0(%arg0: i32, %arg1: i32) -> (i32, i32, i32) {
    %c0_i32 = arith.constant 0 : i32
    %c0_i32_0 = arith.constant 0 : i32
    return %arg0, %arg1, %c0_i32 : i32, i32, i32
  }
  func.func @transform_1(%arg0: i32, %arg1: i32) -> (i32, i32) {
    %c0_i32 = arith.constant 0 : i32
    %c0_i32_0 = arith.constant 0 : i32
    return %c0_i32, %arg1 : i32, i32
  }
  func.func @transform_2(%arg0: i32, %arg1: i32) -> (i32, i32) {
    %c0_i32 = arith.constant 0 : i32
    %c0_i32_0 = arith.constant 0 : i32
    return %c0_i32, %arg1 : i32, i32
  }
  func.func @transform_3(%arg0: i32, %arg1: i32) -> (i32, i32, i32, i32) {
    %c0_i32 = arith.constant 0 : i32
    %c0_i32_0 = arith.constant 0 : i32
    %c0_i32_1 = arith.constant 0 : i32
    return %arg0, %c0_i32, %c0_i32_0, %arg1 : i32, i32, i32, i32
  }
}

</mosaic_0001>

<llo_original>
// kernel: tpu_custom_call.1
$region0: #{tpu_custom_call.1}
  #allocation0 [shape = 'u32[]', space=smem, size = 0x4, offset = 0x4, fixed_abs, tag = 'smem constant byte address 0x4 - core index']
  #allocation1 [shape = 'u32[144,128]{1,0:T(1,128)}', space=vmem, size = 0x12000, scoped, tag = 'internal scratch']
  %s0 = inlined_call_operand.vmem [shape: f32[2,4,256], index: 0, kind: input, shape index: {}]
  %s1 = inlined_call_operand.vmem [shape: f32[9,4], index: 1, kind: input, shape index: {}]
  %s2 = inlined_call_operand.vmem [shape: f32[1,4], index: 2, kind: input, shape index: {}]
  %s3 = inlined_call_operand.hbm [shape: f32[2,4,4,4], index: 3, kind: output, shape index: {}]
  %s4 = sld [smem:[#allocation0]]
  $region22: #{tpu_custom_call.1} parent=0
    _
  %s6 = ssub.s32 1, %s4
  %s7 = scalar_select 0, %s6, %s4
  $region1: #{tpu_custom_call.1} parent=0
    #allocation2 [shape = 'u8[16384]{0}', space=vmem, size = 0x4000, scoped, tag = 'output window, operand 0, single buffered']
    #allocation3 [shape = 's32[1]{0}', space=sflag, size = 0x4, scoped, tag = 'scoped memory for tpu_custom_call.1']
    %8 = vsyncpa [#allocation3], 0
    // Predicated region
    $region2: #{tpu_custom_call.1} parent=1 // pred_check
      _
    $region3: #{tpu_custom_call.1} parent=1 // pred_check_branch
      %10 = sbr.rel (0) target = $region5
    $region4: #{tpu_custom_call.1} parent=1 // pred_region
      _
    $region5: #{tpu_custom_call.1} parent=1 // pred_fallthru
      _
    // Predicated region
    $region6: #{tpu_custom_call.1} parent=1 // pred_check
      _
    $region7: #{tpu_custom_call.1} parent=1 // pred_check_branch
      %12 = sbr.rel (0) target = $region9
    $region8: #{tpu_custom_call.1} parent=1 // pred_region
      _
    $region9: #{tpu_custom_call.1} parent=1 // pred_fallthru
      _
    // Predicated region
    $region10: #{tpu_custom_call.1} parent=1 // pred_check
      _
    $region11: #{tpu_custom_call.1} parent=1 // pred_check_branch
      %14 = sbr.rel (0) target = $region13
    $region12: #{tpu_custom_call.1} parent=1 // pred_region
      _
    $region13: #{tpu_custom_call.1} parent=1 // pred_fallthru
      _
    %v15 = vld [vmem:[%s1] sm:$0xff]
    %v16 = vld [vmem:[%s1 + $0x8] sm:$0x1]
    %v17 = vld [vmem:[%s2] sm:$0x1]
    %v18 = vlaneseq
    %v19 = vshrl.u32 %v18, 7
    %v20 = vadd.s32 %v19, 8
    %vm21 = vcmp.gt.s32.totalorder %v19, 0
    %vm22 = vcmp.gt.s32.totalorder %v20, 0
    %vm23 = vcmp.lt.s32.totalorder %v19, 15
    %vm24 = vcmp.lt.s32.totalorder %v20, 15
    %v25 = vld [vmem:[%s0] sm:$0xff]
    %v27 = vcombine.high %v25, %v25
    %29 = vxpose.xlu0.b32.start [1/16] %v25, 128
    %30 = vxpose.xlu0.b32.cont [2/16] 0.0, 128
    %31 = vxpose.xlu0.b32.cont [3/16] 0.0, 128
    %32 = vxpose.xlu0.b32.cont [4/16] 0.0, 128
    %33 = vxpose.xlu0.b32.cont [5/16] 0.0, 128
    %34 = vxpose.xlu0.b32.cont [6/16] 0.0, 128
    %35 = vxpose.xlu0.b32.cont [7/16] 0.0, 128
    %36 = vxpose.xlu0.b32.cont [8/16] 0.0, 128
    %37 = vxpose.xlu0.b32.cont [9/16] 0.0, 128
    %38 = vxpose.xlu0.b32.cont [10/16] 0.0, 128
    %39 = vxpose.xlu0.b32.cont [11/16] 0.0, 128
    %40 = vxpose.xlu0.b32.cont [12/16] 0.0, 128
    %41 = vxpose.xlu0.b32.cont [13/16] 0.0, 128
    %42 = vxpose.xlu0.b32.cont [14/16] 0.0, 128
    %43 = vxpose.xlu0.b32.cont [15/16] 0.0, 128
    %44 = vxpose.xlu0.b32.end [16/16] 0.0, 128
    %v45 = vpop.trf.xlu0
    %v46 = vpop.trf.xlu0
    %v47 = vpop.trf.xlu0
    %v48 = vpop.trf.xlu0
    %v49 = vpop.trf.xlu0
    %v50 = vpop.trf.xlu0
    %v51 = vpop.trf.xlu0
    %v52 = vpop.trf.xlu0
    %v53 = vpop.trf.xlu0
    %v54 = vpop.trf.xlu0
    %v55 = vpop.trf.xlu0
    %v56 = vpop.trf.xlu0
    %v57 = vpop.trf.xlu0
    %v58 = vpop.trf.xlu0
    %v59 = vpop.trf.xlu0
    %v60 = vpop.trf.xlu0
    %61 = vxpose.xlu0.b32.start [1/16] %v27, 128
    %62 = vxpose.xlu0.b32.cont [2/16] 0.0, 128
    %63 = vxpose.xlu0.b32.cont [3/16] 0.0, 128
    %64 = vxpose.xlu0.b32.cont [4/16] 0.0, 128
    %65 = vxpose.xlu0.b32.cont [5/16] 0.0, 128
    %66 = vxpose.xlu0.b32.cont [6/16] 0.0, 128
    %67 = vxpose.xlu0.b32.cont [7/16] 0.0, 128
    %68 = vxpose.xlu0.b32.cont [8/16] 0.0, 128
    %69 = vxpose.xlu0.b32.cont [9/16] 0.0, 128
    %70 = vxpose.xlu0.b32.cont [10/16] 0.0, 128
    %71 = vxpose.xlu0.b32.cont [11/16] 0.0, 128
    %72 = vxpose.xlu0.b32.cont [12/16] 0.0, 128
    %73 = vxpose.xlu0.b32.cont [13/16] 0.0, 128
    %74 = vxpose.xlu0.b32.cont [14/16] 0.0, 128
    %75 = vxpose.xlu0.b32.cont [15/16] 0.0, 128
    %76 = vxpose.xlu0.b32.end [16/16] 0.0, 128
    %v77 = vpop.trf.xlu0
    %v78 = vpop.trf.xlu0
    %v79 = vpop.trf.xlu0
    %v80 = vpop.trf.xlu0
    %v81 = vpop.trf.xlu0
    %v82 = vpop.trf.xlu0
    %v83 = vpop.trf.xlu0
    %v84 = vpop.trf.xlu0
    %v85 = vpop.trf.xlu0
    %v86 = vpop.trf.xlu0
    %v87 = vpop.trf.xlu0
    %v88 = vpop.trf.xlu0
    %v89 = vpop.trf.xlu0
    %v90 = vpop.trf.xlu0
    %v91 = vpop.trf.xlu0
    %v92 = vpop.trf.xlu0
    %v93 = vrot.slane %v45, 7
    %v94 = vrot.slane %v47, 7
    %v95 = vrot.slane %v49, 7
    %v96 = vrot.slane %v51, 7
    %v97 = vrot.slane %v53, 7
    %v98 = vrot.slane %v55, 7
    %v99 = vrot.slane %v57, 7
    %v100 = vrot.slane %v59, 7
    %v101 = vrot.slane %v77, 7
    %v102 = vrot.slane %v79, 7
    %v103 = vrot.slane %v81, 7
    %v104 = vrot.slane %v83, 7
    %v105 = vrot.slane %v85, 7
    %v106 = vrot.slane %v87, 7
    %v107 = vrot.slane %v89, 7
    %v108 = vrot.slane %v91, 7
    %v109 = vrot.slane %v46, 7
    %v110 = vrot.slane %v48, 7
    %v111 = vrot.slane %v50, 7
    %v112 = vrot.slane %v52, 7
    %v113 = vrot.slane %v54, 7
    %v114 = vrot.slane %v56, 7
    %v115 = vrot.slane %v58, 7
    %v116 = vrot.slane %v60, 7
    %v117 = vrot.slane %v78, 7
    %v118 = vrot.slane %v80, 7
    %v119 = vrot.slane %v82, 7
    %v120 = vrot.slane %v84, 7
    %v121 = vrot.slane %v86, 7
    %v122 = vrot.slane %v88, 7
    %v123 = vrot.slane %v90, 7
    %v124 = vrot.slane %v92, 7
    %vm125 = vcmp.lt.s32.totalorder %v19, 1
    %v126 = vsel %vm125, %v93, %v109
    %v127 = vsel %vm125, %v94, %v110
    %v128 = vsel %vm125, %v95, %v111
    %v129 = vsel %vm125, %v96, %v112
    %v130 = vsel %vm125, %v97, %v113
    %v131 = vsel %vm125, %v98, %v114
    %v132 = vsel %vm125, %v99, %v115
    %v133 = vsel %vm125, %v100, %v116
    %v134 = vsel %vm125, %v101, %v117
    %v135 = vsel %vm125, %v102, %v118
    %v136 = vsel %vm125, %v103, %v119
    %v137 = vsel %vm125, %v104, %v120
    %v138 = vsel %vm125, %v105, %v121
    %v139 = vsel %vm125, %v106, %v122
    %v140 = vsel %vm125, %v107, %v123
    %v141 = vsel %vm125, %v108, %v124
    %v142 = vsel %vm125, %v109, %v93
    %v143 = vsel %vm125, %v110, %v94
    %v144 = vsel %vm125, %v111, %v95
    %v145 = vsel %vm125, %v112, %v96
    %v146 = vsel %vm125, %v113, %v97
    %v147 = vsel %vm125, %v114, %v98
    %v148 = vsel %vm125, %v115, %v99
    %v149 = vsel %vm125, %v116, %v100
    %v150 = vsel %vm125, %v117, %v101
    %v151 = vsel %vm125, %v118, %v102
    %v152 = vsel %vm125, %v119, %v103
    %v153 = vsel %vm125, %v120, %v104
    %v154 = vsel %vm125, %v121, %v105
    %v155 = vsel %vm125, %v122, %v106
    %v156 = vsel %vm125, %v123, %v107
    %v157 = vsel %vm125, %v124, %v108
    %v158 = vsel %vm21, 0.0, 0.0
    %v159 = vsel %vm22, 0.0, 0.0
    %v160 = vsel %vm21, %v142, 0.0
    %v161 = vsel %vm22, %v126, 0.0
    %v162 = vsel %vm21, %v143, 0.0
    %v163 = vsel %vm22, %v127, 0.0
    %v164 = vsel %vm21, %v144, 0.0
    %v165 = vsel %vm22, %v128, 0.0
    %v166 = vsel %vm21, %v145, 0.0
    %v167 = vsel %vm22, %v129, 0.0
    %v168 = vsel %vm21, %v146, 0.0
    %v169 = vsel %vm22, %v130, 0.0
    %v170 = vsel %vm21, %v147, 0.0
    %v171 = vsel %vm22, %v131, 0.0
    %v172 = vsel %vm21, %v148, 0.0
    %v173 = vsel %vm22, %v132, 0.0
    %v174 = vsel %vm21, %v149, 0.0
    %v175 = vsel %vm22, %v133, 0.0
    %v176 = vsel %vm21, %v150, 0.0
    %v177 = vsel %vm22, %v134, 0.0
    %v178 = vsel %vm21, %v151, 0.0
    %v179 = vsel %vm22, %v135, 0.0
    %v180 = vsel %vm21, %v152, 0.0
    %v181 = vsel %vm22, %v136, 0.0
    %v182 = vsel %vm21, %v153, 0.0
    %v183 = vsel %vm22, %v137, 0.0
    %v184 = vsel %vm21, %v154, 0.0
    %v185 = vsel %vm22, %v138, 0.0
    %v186 = vsel %vm21, %v155, 0.0
    %v187 = vsel %vm22, %v139, 0.0
    %v188 = vsel %vm21, %v156, 0.0
    %v189 = vsel %vm22, %v140, 0.0
    %v190 = vsel %vm21, %v157, 0.0
    %v191 = vsel %vm22, %v141, 0.0
    %v192 = vlaneseq
    %v193 = vshrl.u32 %v192, 7
    %v194 = vsub.s32 0, %v193
    %v195 = vrot.slane %v15, %v194
    %v196 = vmul.f32 %v158, %v195
    %v197 = vmul.f32 %v159, %v195
    %v198 = vmul.f32 %v160, %v195
    %v199 = vmul.f32 %v161, %v195
    %v200 = vmul.f32 %v162, %v195
    %v201 = vmul.f32 %v163, %v195
    %v202 = vmul.f32 %v164, %v195
    %v203 = vmul.f32 %v165, %v195
    %v204 = vmul.f32 %v166, %v195
    %v205 = vmul.f32 %v167, %v195
    %v206 = vmul.f32 %v168, %v195
    %v207 = vmul.f32 %v169, %v195
    %v208 = vmul.f32 %v170, %v195
    %v209 = vmul.f32 %v171, %v195
    %v210 = vmul.f32 %v172, %v195
    %v211 = vmul.f32 %v173, %v195
    %v212 = vmul.f32 %v174, %v195
    %v213 = vmul.f32 %v175, %v195
    %v214 = vmul.f32 %v176, %v195
    %v215 = vmul.f32 %v177, %v195
    %v216 = vmul.f32 %v178, %v195
    %v217 = vmul.f32 %v179, %v195
    %v218 = vmul.f32 %v180, %v195
    %v219 = vmul.f32 %v181, %v195
    %v220 = vmul.f32 %v182, %v195
    %v221 = vmul.f32 %v183, %v195
    %v222 = vmul.f32 %v184, %v195
    %v223 = vmul.f32 %v185, %v195
    %v224 = vmul.f32 %v186, %v195
    %v225 = vmul.f32 %v187, %v195
    %v226 = vmul.f32 %v188, %v195
    %v227 = vmul.f32 %v189, %v195
    %v228 = vlaneseq
    %v229 = vshrl.u32 %v228, 7
    %v230 = vsub.s32 3, %v229
    %v231 = vrot.slane %v15, %v230
    %v232 = vmul.f32 %v160, %v231
    %v233 = vmul.f32 %v161, %v231
    %v234 = vmul.f32 %v162, %v231
    %v235 = vmul.f32 %v163, %v231
    %v236 = vmul.f32 %v164, %v231
    %v237 = vmul.f32 %v165, %v231
    %v238 = vmul.f32 %v166, %v231
    %v239 = vmul.f32 %v167, %v231
    %v240 = vmul.f32 %v168, %v231
    %v241 = vmul.f32 %v169, %v231
    %v242 = vmul.f32 %v170, %v231
    %v243 = vmul.f32 %v171, %v231
    %v244 = vmul.f32 %v172, %v231
    %v245 = vmul.f32 %v173, %v231
    %v246 = vmul.f32 %v174, %v231
    %v247 = vmul.f32 %v175, %v231
    %v248 = vmul.f32 %v176, %v231
    %v249 = vmul.f32 %v177, %v231
    %v250 = vmul.f32 %v178, %v231
    %v251 = vmul.f32 %v179, %v231
    %v252 = vmul.f32 %v180, %v231
    %v253 = vmul.f32 %v181, %v231
    %v254 = vmul.f32 %v182, %v231
    %v255 = vmul.f32 %v183, %v231
    %v256 = vmul.f32 %v184, %v231
    %v257 = vmul.f32 %v185, %v231
    %v258 = vmul.f32 %v186, %v231
    %v259 = vmul.f32 %v187, %v231
    %v260 = vmul.f32 %v188, %v231
    %v261 = vmul.f32 %v189, %v231
    %v262 = vmul.f32 %v190, %v231
    %v263 = vmul.f32 %v191, %v231
    %v264 = vadd.f32 %v196, %v232
    %v265 = vadd.f32 %v197, %v233
    %v266 = vadd.f32 %v198, %v234
    %v267 = vadd.f32 %v199, %v235
    %v268 = vadd.f32 %v200, %v236
    %v269 = vadd.f32 %v201, %v237
    %v270 = vadd.f32 %v202, %v238
    %v271 = vadd.f32 %v203, %v239
    %v272 = vadd.f32 %v204, %v240
    %v273 = vadd.f32 %v205, %v241
    %v274 = vadd.f32 %v206, %v242
    %v275 = vadd.f32 %v207, %v243
    %v276 = vadd.f32 %v208, %v244
    %v277 = vadd.f32 %v209, %v245
    %v278 = vadd.f32 %v210, %v246
    %v279 = vadd.f32 %v211, %v247
    %v280 = vadd.f32 %v212, %v248
    %v281 = vadd.f32 %v213, %v249
    %v282 = vadd.f32 %v214, %v250
    %v283 = vadd.f32 %v215, %v251
    %v284 = vadd.f32 %v216, %v252
    %v285 = vadd.f32 %v217, %v253
    %v286 = vadd.f32 %v218, %v254
    %v287 = vadd.f32 %v219, %v255
    %v288 = vadd.f32 %v220, %v256
    %v289 = vadd.f32 %v221, %v257
    %v290 = vadd.f32 %v222, %v258
    %v291 = vadd.f32 %v223, %v259
    %v292 = vadd.f32 %v224, %v260
    %v293 = vadd.f32 %v225, %v261
    %v294 = vadd.f32 %v226, %v262
    %v295 = vadd.f32 %v227, %v263
    %v296 = vlaneseq
    %v297 = vshrl.u32 %v296, 7
    %v298 = vsub.s32 6, %v297
    %v299 = vrot.slane %v15, %v298
    %v300 = vmul.f32 %v162, %v299
    %v301 = vmul.f32 %v163, %v299
    %v302 = vmul.f32 %v164, %v299
    %v303 = vmul.f32 %v165, %v299
    %v304 = vmul.f32 %v166, %v299
    %v305 = vmul.f32 %v167, %v299
    %v306 = vmul.f32 %v168, %v299
    %v307 = vmul.f32 %v169, %v299
    %v308 = vmul.f32 %v170, %v299
    %v309 = vmul.f32 %v171, %v299
    %v310 = vmul.f32 %v172, %v299
    %v311 = vmul.f32 %v173, %v299
    %v312 = vmul.f32 %v174, %v299
    %v313 = vmul.f32 %v175, %v299
    %v314 = vmul.f32 %v176, %v299
    %v315 = vmul.f32 %v177, %v299
    %v316 = vmul.f32 %v178, %v299
    %v317 = vmul.f32 %v179, %v299
    %v318 = vmul.f32 %v180, %v299
    %v319 = vmul.f32 %v181, %v299
    %v320 = vmul.f32 %v182, %v299
    %v321 = vmul.f32 %v183, %v299
    %v322 = vmul.f32 %v184, %v299
    %v323 = vmul.f32 %v185, %v299
    %v324 = vmul.f32 %v186, %v299
    %v325 = vmul.f32 %v187, %v299
    %v326 = vmul.f32 %v188, %v299
    %v327 = vmul.f32 %v189, %v299
    %v328 = vmul.f32 %v190, %v299
    %v329 = vmul.f32 %v191, %v299
    %v330 = vmul.f32 %v158, %v299
    %v331 = vmul.f32 %v159, %v299
    %v332 = vadd.f32 %v264, %v300
    %v333 = vadd.f32 %v265, %v301
    %v334 = vadd.f32 %v266, %v302
    %v335 = vadd.f32 %v267, %v303
    %v336 = vadd.f32 %v268, %v304
    %v337 = vadd.f32 %v269, %v305
    %v338 = vadd.f32 %v270, %v306
    %v339 = vadd.f32 %v271, %v307
    %v340 = vadd.f32 %v272, %v308
    %v341 = vadd.f32 %v273, %v309
    %v342 = vadd.f32 %v274, %v310
    %v343 = vadd.f32 %v275, %v311
    %v344 = vadd.f32 %v276, %v312
    %v345 = vadd.f32 %v277, %v313
    %v346 = vadd.f32 %v278, %v314
    %v347 = vadd.f32 %v279, %v315
    %v348 = vadd.f32 %v280, %v316
    %v349 = vadd.f32 %v281, %v317
    %v350 = vadd.f32 %v282, %v318
    %v351 = vadd.f32 %v283, %v319
    %v352 = vadd.f32 %v284, %v320
    %v353 = vadd.f32 %v285, %v321
    %v354 = vadd.f32 %v286, %v322
    %v355 = vadd.f32 %v287, %v323
    %v356 = vadd.f32 %v288, %v324
    %v357 = vadd.f32 %v289, %v325
    %v358 = vadd.f32 %v290, %v326
    %v359 = vadd.f32 %v291, %v327
    %v360 = vadd.f32 %v292, %v328
    %v361 = vadd.f32 %v293, %v329
    %v362 = vadd.f32 %v294, %v330
    %v363 = vadd.f32 %v295, %v331
    %v364 = vlaneseq
    %v365 = vshrl.u32 %v364, 7
    %v366 = vsub.s32 1, %v365
    %v367 = vrot.slane %v15, %v366
    %v368 = vmul.f32 %v367, 0.0
    %v369 = vmul.f32 %v45, %v367
    %v370 = vmul.f32 %v46, %v367
    %v371 = vmul.f32 %v47, %v367
    %v372 = vmul.f32 %v48, %v367
    %v373 = vmul.f32 %v49, %v367
    %v374 = vmul.f32 %v50, %v367
    %v375 = vmul.f32 %v51, %v367
    %v376 = vmul.f32 %v52, %v367
    %v377 = vmul.f32 %v53, %v367
    %v378 = vmul.f32 %v54, %v367
    %v379 = vmul.f32 %v55, %v367
    %v380 = vmul.f32 %v56, %v367
    %v381 = vmul.f32 %v57, %v367
    %v382 = vmul.f32 %v58, %v367
    %v383 = vmul.f32 %v59, %v367
    %v384 = vmul.f32 %v60, %v367
    %v385 = vmul.f32 %v77, %v367
    %v386 = vmul.f32 %v78, %v367
    %v387 = vmul.f32 %v79, %v367
    %v388 = vmul.f32 %v80, %v367
    %v389 = vmul.f32 %v81, %v367
    %v390 = vmul.f32 %v82, %v367
    %v391 = vmul.f32 %v83, %v367
    %v392 = vmul.f32 %v84, %v367
    %v393 = vmul.f32 %v85, %v367
    %v394 = vmul.f32 %v86, %v367
    %v395 = vmul.f32 %v87, %v367
    %v396 = vmul.f32 %v88, %v367
    %v397 = vmul.f32 %v89, %v367
    %v398 = vmul.f32 %v90, %v367
    %v399 = vadd.f32 %v332, %v368
    %v400 = vadd.f32 %v333, %v368
    %v401 = vadd.f32 %v334, %v369
    %v402 = vadd.f32 %v335, %v370
    %v403 = vadd.f32 %v336, %v371
    %v404 = vadd.f32 %v337, %v372
    %v405 = vadd.f32 %v338, %v373
    %v406 = vadd.f32 %v339, %v374
    %v407 = vadd.f32 %v340, %v375
    %v408 = vadd.f32 %v341, %v376
    %v409 = vadd.f32 %v342, %v377
    %v410 = vadd.f32 %v343, %v378
    %v411 = vadd.f32 %v344, %v379
    %v412 = vadd.f32 %v345, %v380
    %v413 = vadd.f32 %v346, %v381
    %v414 = vadd.f32 %v347, %v382
    %v415 = vadd.f32 %v348, %v383
    %v416 = vadd.f32 %v349, %v384
    %v417 = vadd.f32 %v350, %v385
    %v418 = vadd.f32 %v351, %v386
    %v419 = vadd.f32 %v352, %v387
    %v420 = vadd.f32 %v353, %v388
    %v421 = vadd.f32 %v354, %v389
    %v422 = vadd.f32 %v355, %v390
    %v423 = vadd.f32 %v356, %v391
    %v424 = vadd.f32 %v357, %v392
    %v425 = vadd.f32 %v358, %v393
    %v426 = vadd.f32 %v359, %v394
    %v427 = vadd.f32 %v360, %v395
    %v428 = vadd.f32 %v361, %v396
    %v429 = vadd.f32 %v362, %v397
    %v430 = vadd.f32 %v363, %v398
    %v431 = vlaneseq
    %v432 = vshrl.u32 %v431, 7
    %v433 = vsub.s32 4, %v432
    %v434 = vrot.slane %v15, %v433
    %v435 = vmul.f32 %v45, %v434
    %v436 = vmul.f32 %v46, %v434
    %v437 = vmul.f32 %v47, %v434
    %v438 = vmul.f32 %v48, %v434
    %v439 = vmul.f32 %v49, %v434
    %v440 = vmul.f32 %v50, %v434
    %v441 = vmul.f32 %v51, %v434
    %v442 = vmul.f32 %v52, %v434
    %v443 = vmul.f32 %v53, %v434
    %v444 = vmul.f32 %v54, %v434
    %v445 = vmul.f32 %v55, %v434
    %v446 = vmul.f32 %v56, %v434
    %v447 = vmul.f32 %v57, %v434
    %v448 = vmul.f32 %v58, %v434
    %v449 = vmul.f32 %v59, %v434
    %v450 = vmul.f32 %v60, %v434
    %v451 = vmul.f32 %v77, %v434
    %v452 = vmul.f32 %v78, %v434
    %v453 = vmul.f32 %v79, %v434
    %v454 = vmul.f32 %v80, %v434
    %v455 = vmul.f32 %v81, %v434
    %v456 = vmul.f32 %v82, %v434
    %v457 = vmul.f32 %v83, %v434
    %v458 = vmul.f32 %v84, %v434
    %v459 = vmul.f32 %v85, %v434
    %v460 = vmul.f32 %v86, %v434
    %v461 = vmul.f32 %v87, %v434
    %v462 = vmul.f32 %v88, %v434
    %v463 = vmul.f32 %v89, %v434
    %v464 = vmul.f32 %v90, %v434
    %v465 = vmul.f32 %v91, %v434
    %v466 = vmul.f32 %v92, %v434
    %v467 = vadd.f32 %v399, %v435
    %v468 = vadd.f32 %v400, %v436
    %v469 = vadd.f32 %v401, %v437
    %v470 = vadd.f32 %v402, %v438
    %v471 = vadd.f32 %v403, %v439
    %v472 = vadd.f32 %v404, %v440
    %v473 = vadd.f32 %v405, %v441
    %v474 = vadd.f32 %v406, %v442
    %v475 = vadd.f32 %v407, %v443
    %v476 = vadd.f32 %v408, %v444
    %v477 = vadd.f32 %v409, %v445
    %v478 = vadd.f32 %v410, %v446
    %v479 = vadd.f32 %v411, %v447
    %v480 = vadd.f32 %v412, %v448
    %v481 = vadd.f32 %v413, %v449
    %v482 = vadd.f32 %v414, %v450
    %v483 = vadd.f32 %v415, %v451
    %v484 = vadd.f32 %v416, %v452
    %v485 = vadd.f32 %v417, %v453
    %v486 = vadd.f32 %v418, %v454
    %v487 = vadd.f32 %v419, %v455
    %v488 = vadd.f32 %v420, %v456
    %v489 = vadd.f32 %v421, %v457
    %v490 = vadd.f32 %v422, %v458
    %v491 = vadd.f32 %v423, %v459
    %v492 = vadd.f32 %v424, %v460
    %v493 = vadd.f32 %v425, %v461
    %v494 = vadd.f32 %v426, %v462
    %v495 = vadd.f32 %v427, %v463
    %v496 = vadd.f32 %v428, %v464
    %v497 = vadd.f32 %v429, %v465
    %v498 = vadd.f32 %v430, %v466
    %v499 = vlaneseq
    %v500 = vshrl.u32 %v499, 7
    %v501 = vsub.s32 7, %v500
    %v502 = vrot.slane %v15, %v501
    %v503 = vmul.f32 %v47, %v502
    %v504 = vmul.f32 %v48, %v502
    %v505 = vmul.f32 %v49, %v502
    %v506 = vmul.f32 %v50, %v502
    %v507 = vmul.f32 %v51, %v502
    %v508 = vmul.f32 %v52, %v502
    %v509 = vmul.f32 %v53, %v502
    %v510 = vmul.f32 %v54, %v502
    %v511 = vmul.f32 %v55, %v502
    %v512 = vmul.f32 %v56, %v502
    %v513 = vmul.f32 %v57, %v502
    %v514 = vmul.f32 %v58, %v502
    %v515 = vmul.f32 %v59, %v502
    %v516 = vmul.f32 %v60, %v502
    %v517 = vmul.f32 %v77, %v502
    %v518 = vmul.f32 %v78, %v502
    %v519 = vmul.f32 %v79, %v502
    %v520 = vmul.f32 %v80, %v502
    %v521 = vmul.f32 %v81, %v502
    %v522 = vmul.f32 %v82, %v502
    %v523 = vmul.f32 %v83, %v502
    %v524 = vmul.f32 %v84, %v502
    %v525 = vmul.f32 %v85, %v502
    %v526 = vmul.f32 %v86, %v502
    %v527 = vmul.f32 %v87, %v502
    %v528 = vmul.f32 %v88, %v502
    %v529 = vmul.f32 %v89, %v502
    %v530 = vmul.f32 %v90, %v502
    %v531 = vmul.f32 %v91, %v502
    %v532 = vmul.f32 %v92, %v502
    %v533 = vmul.f32 %v502, 0.0
    %v534 = vadd.f32 %v467, %v503
    %v535 = vadd.f32 %v468, %v504
    %v536 = vadd.f32 %v469, %v505
    %v537 = vadd.f32 %v470, %v506
    %v538 = vadd.f32 %v471, %v507
    %v539 = vadd.f32 %v472, %v508
    %v540 = vadd.f32 %v473, %v509
    %v541 = vadd.f32 %v474, %v510
    %v542 = vadd.f32 %v475, %v511
    %v543 = vadd.f32 %v476, %v512
    %v544 = vadd.f32 %v477, %v513
    %v545 = vadd.f32 %v478, %v514
    %v546 = vadd.f32 %v479, %v515
    %v547 = vadd.f32 %v480, %v516
    %v548 = vadd.f32 %v481, %v517
    %v549 = vadd.f32 %v482, %v518
    %v550 = vadd.f32 %v483, %v519
    %v551 = vadd.f32 %v484, %v520
    %v552 = vadd.f32 %v485, %v521
    %v553 = vadd.f32 %v486, %v522
    %v554 = vadd.f32 %v487, %v523
    %v555 = vadd.f32 %v488, %v524
    %v556 = vadd.f32 %v489, %v525
    %v557 = vadd.f32 %v490, %v526
    %v558 = vadd.f32 %v491, %v527
    %v559 = vadd.f32 %v492, %v528
    %v560 = vadd.f32 %v493, %v529
    %v561 = vadd.f32 %v494, %v530
    %v562 = vadd.f32 %v495, %v531
    %v563 = vadd.f32 %v496, %v532
    %v564 = vadd.f32 %v497, %v533
    %v565 = vadd.f32 %v498, %v533
    %v566 = vrot.slane %v45, 1
    %v567 = vrot.slane %v47, 1
    %v568 = vrot.slane %v49, 1
    %v569 = vrot.slane %v51, 1
    %v570 = vrot.slane %v53, 1
    %v571 = vrot.slane %v55, 1
    %v572 = vrot.slane %v57, 1
    %v573 = vrot.slane %v59, 1
    %v574 = vrot.slane %v77, 1
    %v575 = vrot.slane %v79, 1
    %v576 = vrot.slane %v81, 1
    %v577 = vrot.slane %v83, 1
    %v578 = vrot.slane %v85, 1
    %v579 = vrot.slane %v87, 1
    %v580 = vrot.slane %v89, 1
    %v581 = vrot.slane %v91, 1
    %v582 = vrot.slane %v46, 1
    %v583 = vrot.slane %v48, 1
    %v584 = vrot.slane %v50, 1
    %v585 = vrot.slane %v52, 1
    %v586 = vrot.slane %v54, 1
    %v587 = vrot.slane %v56, 1
    %v588 = vrot.slane %v58, 1
    %v589 = vrot.slane %v60, 1
    %v590 = vrot.slane %v78, 1
    %v591 = vrot.slane %v80, 1
    %v592 = vrot.slane %v82, 1
    %v593 = vrot.slane %v84, 1
    %v594 = vrot.slane %v86, 1
    %v595 = vrot.slane %v88, 1
    %v596 = vrot.slane %v90, 1
    %v597 = vrot.slane %v92, 1
    %vm598 = vcmp.lt.s32.totalorder %v19, 7
    %v599 = vsel %vm598, %v566, %v582
    %v600 = vsel %vm598, %v567, %v583
    %v601 = vsel %vm598, %v568, %v584
    %v602 = vsel %vm598, %v569, %v585
    %v603 = vsel %vm598, %v570, %v586
    %v604 = vsel %vm598, %v571, %v587
    %v605 = vsel %vm598, %v572, %v588
    %v606 = vsel %vm598, %v573, %v589
    %v607 = vsel %vm598, %v574, %v590
    %v608 = vsel %vm598, %v575, %v591
    %v609 = vsel %vm598, %v576, %v592
    %v610 = vsel %vm598, %v577, %v593
    %v611 = vsel %vm598, %v578, %v594
    %v612 = vsel %vm598, %v579, %v595
    %v613 = vsel %vm598, %v580, %v596
    %v614 = vsel %vm598, %v581, %v597
    %v615 = vsel %vm598, %v582, %v566
    %v616 = vsel %vm598, %v583, %v567
    %v617 = vsel %vm598, %v584, %v568
    %v618 = vsel %vm598, %v585, %v569
    %v619 = vsel %vm598, %v586, %v570
    %v620 = vsel %vm598, %v587, %v571
    %v621 = vsel %vm598, %v588, %v572
    %v622 = vsel %vm598, %v589, %v573
    %v623 = vsel %vm598, %v590, %v574
    %v624 = vsel %vm598, %v591, %v575
    %v625 = vsel %vm598, %v592, %v576
    %v626 = vsel %vm598, %v593, %v577
    %v627 = vsel %vm598, %v594, %v578
    %v628 = vsel %vm598, %v595, %v579
    %v629 = vsel %vm598, %v596, %v580
    %v630 = vsel %vm598, %v597, %v581
    %v631 = vsel %vm23, 0.0, 0.0
    %v632 = vsel %vm24, 0.0, 0.0
    %v633 = vsel %vm23, %v599, 0.0
    %v634 = vsel %vm24, %v615, 0.0
    %v635 = vsel %vm23, %v600, 0.0
    %v636 = vsel %vm24, %v616, 0.0
    %v637 = vsel %vm23, %v601, 0.0
    %v638 = vsel %vm24, %v617, 0.0
    %v639 = vsel %vm23, %v602, 0.0
    %v640 = vsel %vm24, %v618, 0.0
    %v641 = vsel %vm23, %v603, 0.0
    %v642 = vsel %vm24, %v619, 0.0
    %v643 = vsel %vm23, %v604, 0.0
    %v644 = vsel %vm24, %v620, 0.0
    %v645 = vsel %vm23, %v605, 0.0
    %v646 = vsel %vm24, %v621, 0.0
    %v647 = vsel %vm23, %v606, 0.0
    %v648 = vsel %vm24, %v622, 0.0
    %v649 = vsel %vm23, %v607, 0.0
    %v650 = vsel %vm24, %v623, 0.0
    %v651 = vsel %vm23, %v608, 0.0
    %v652 = vsel %vm24, %v624, 0.0
    %v653 = vsel %vm23, %v609, 0.0
    %v654 = vsel %vm24, %v625, 0.0
    %v655 = vsel %vm23, %v610, 0.0
    %v656 = vsel %vm24, %v626, 0.0
    %v657 = vsel %vm23, %v611, 0.0
    %v658 = vsel %vm24, %v627, 0.0
    %v659 = vsel %vm23, %v612, 0.0
    %v660 = vsel %vm24, %v628, 0.0
    %v661 = vsel %vm23, %v613, 0.0
    %v662 = vsel %vm24, %v629, 0.0
    %v663 = vsel %vm23, %v614, 0.0
    %v664 = vsel %vm24, %v630, 0.0
    %v665 = vlaneseq
    %v666 = vshrl.u32 %v665, 7
    %v667 = vsub.s32 2, %v666
    %v668 = vrot.slane %v15, %v667
    %v669 = vmul.f32 %v631, %v668
    %v670 = vmul.f32 %v632, %v668
    %v671 = vmul.f32 %v633, %v668
    %v672 = vmul.f32 %v634, %v668
    %v673 = vmul.f32 %v635, %v668
    %v674 = vmul.f32 %v636, %v668
    %v675 = vmul.f32 %v637, %v668
    %v676 = vmul.f32 %v638, %v668
    %v677 = vmul.f32 %v639, %v668
    %v678 = vmul.f32 %v640, %v668
    %v679 = vmul.f32 %v641, %v668
    %v680 = vmul.f32 %v642, %v668
    %v681 = vmul.f32 %v643, %v668
    %v682 = vmul.f32 %v644, %v668
    %v683 = vmul.f32 %v645, %v668
    %v684 = vmul.f32 %v646, %v668
    %v685 = vmul.f32 %v647, %v668
    %v686 = vmul.f32 %v648, %v668
    %v687 = vmul.f32 %v649, %v668
    %v688 = vmul.f32 %v650, %v668
    %v689 = vmul.f32 %v651, %v668
    %v690 = vmul.f32 %v652, %v668
    %v691 = vmul.f32 %v653, %v668
    %v692 = vmul.f32 %v654, %v668
    %v693 = vmul.f32 %v655, %v668
    %v694 = vmul.f32 %v656, %v668
    %v695 = vmul.f32 %v657, %v668
    %v696 = vmul.f32 %v658, %v668
    %v697 = vmul.f32 %v659, %v668
    %v698 = vmul.f32 %v660, %v668
    %v699 = vmul.f32 %v661, %v668
    %v700 = vmul.f32 %v662, %v668
    %v701 = vadd.f32 %v534, %v669
    %v702 = vadd.f32 %v535, %v670
    %v703 = vadd.f32 %v536, %v671
    %v704 = vadd.f32 %v537, %v672
    %v705 = vadd.f32 %v538, %v673
    %v706 = vadd.f32 %v539, %v674
    %v707 = vadd.f32 %v540, %v675
    %v708 = vadd.f32 %v541, %v676
    %v709 = vadd.f32 %v542, %v677
    %v710 = vadd.f32 %v543, %v678
    %v711 = vadd.f32 %v544, %v679
    %v712 = vadd.f32 %v545, %v680
    %v713 = vadd.f32 %v546, %v681
    %v714 = vadd.f32 %v547, %v682
    %v715 = vadd.f32 %v548, %v683
    %v716 = vadd.f32 %v549, %v684
    %v717 = vadd.f32 %v550, %v685
    %v718 = vadd.f32 %v551, %v686
    %v719 = vadd.f32 %v552, %v687
    %v720 = vadd.f32 %v553, %v688
    %v721 = vadd.f32 %v554, %v689
    %v722 = vadd.f32 %v555, %v690
    %v723 = vadd.f32 %v556, %v691
    %v724 = vadd.f32 %v557, %v692
    %v725 = vadd.f32 %v558, %v693
    %v726 = vadd.f32 %v559, %v694
    %v727 = vadd.f32 %v560, %v695
    %v728 = vadd.f32 %v561, %v696
    %v729 = vadd.f32 %v562, %v697
    %v730 = vadd.f32 %v563, %v698
    %v731 = vadd.f32 %v564, %v699
    %v732 = vadd.f32 %v565, %v700
    %v733 = vlaneseq
    %v734 = vshrl.u32 %v733, 7
    %v735 = vsub.s32 5, %v734
    %v736 = vrot.slane %v15, %v735
    %v737 = vmul.f32 %v633, %v736
    %v738 = vmul.f32 %v634, %v736
    %v739 = vmul.f32 %v635, %v736
    %v740 = vmul.f32 %v636, %v736
    %v741 = vmul.f32 %v637, %v736
    %v742 = vmul.f32 %v638, %v736
    %v743 = vmul.f32 %v639, %v736
    %v744 = vmul.f32 %v640, %v736
    %v745 = vmul.f32 %v641, %v736
    %v746 = vmul.f32 %v642, %v736
    %v747 = vmul.f32 %v643, %v736
    %v748 = vmul.f32 %v644, %v736
    %v749 = vmul.f32 %v645, %v736
    %v750 = vmul.f32 %v646, %v736
    %v751 = vmul.f32 %v647, %v736
    %v752 = vmul.f32 %v648, %v736
    %v753 = vmul.f32 %v649, %v736
    %v754 = vmul.f32 %v650, %v736
    %v755 = vmul.f32 %v651, %v736
    %v756 = vmul.f32 %v652, %v736
    %v757 = vmul.f32 %v653, %v736
    %v758 = vmul.f32 %v654, %v736
    %v759 = vmul.f32 %v655, %v736
    %v760 = vmul.f32 %v656, %v736
    %v761 = vmul.f32 %v657, %v736
    %v762 = vmul.f32 %v658, %v736
    %v763 = vmul.f32 %v659, %v736
    %v764 = vmul.f32 %v660, %v736
    %v765 = vmul.f32 %v661, %v736
    %v766 = vmul.f32 %v662, %v736
    %v767 = vmul.f32 %v663, %v736
    %v768 = vmul.f32 %v664, %v736
    %v769 = vadd.f32 %v701, %v737
    %v770 = vadd.f32 %v702, %v738
    %v771 = vadd.f32 %v703, %v739
    %v772 = vadd.f32 %v704, %v740
    %v773 = vadd.f32 %v705, %v741
    %v774 = vadd.f32 %v706, %v742
    %v775 = vadd.f32 %v707, %v743
    %v776 = vadd.f32 %v708, %v744
    %v777 = vadd.f32 %v709, %v745
    %v778 = vadd.f32 %v710, %v746
    %v779 = vadd.f32 %v711, %v747
    %v780 = vadd.f32 %v712, %v748
    %v781 = vadd.f32 %v713, %v749
    %v782 = vadd.f32 %v714, %v750
    %v783 = vadd.f32 %v715, %v751
    %v784 = vadd.f32 %v716, %v752
    %v785 = vadd.f32 %v717, %v753
    %v786 = vadd.f32 %v718, %v754
    %v787 = vadd.f32 %v719, %v755
    %v788 = vadd.f32 %v720, %v756
    %v789 = vadd.f32 %v721, %v757
    %v790 = vadd.f32 %v722, %v758
    %v791 = vadd.f32 %v723, %v759
    %v792 = vadd.f32 %v724, %v760
    %v793 = vadd.f32 %v725, %v761
    %v794 = vadd.f32 %v726, %v762
    %v795 = vadd.f32 %v727, %v763
    %v796 = vadd.f32 %v728, %v764
    %v797 = vadd.f32 %v729, %v765
    %v798 = vadd.f32 %v730, %v766
    %v799 = vadd.f32 %v731, %v767
    %v800 = vadd.f32 %v732, %v768
    %v801 = vlaneseq
    %v802 = vshrl.u32 %v801, 7
    %v803 = vsub.s32 0, %v802
    %v804 = vrot.slane %v16, %v803
    %v805 = vmul.f32 %v635, %v804
    %v806 = vmul.f32 %v636, %v804
    %v807 = vmul.f32 %v637, %v804
    %v808 = vmul.f32 %v638, %v804
    %v809 = vmul.f32 %v639, %v804
    %v810 = vmul.f32 %v640, %v804
    %v811 = vmul.f32 %v641, %v804
    %v812 = vmul.f32 %v642, %v804
    %v813 = vmul.f32 %v643, %v804
    %v814 = vmul.f32 %v644, %v804
    %v815 = vmul.f32 %v645, %v804
    %v816 = vmul.f32 %v646, %v804
    %v817 = vmul.f32 %v647, %v804
    %v818 = vmul.f32 %v648, %v804
    %v819 = vmul.f32 %v649, %v804
    %v820 = vmul.f32 %v650, %v804
    %v821 = vmul.f32 %v651, %v804
    %v822 = vmul.f32 %v652, %v804
    %v823 = vmul.f32 %v653, %v804
    %v824 = vmul.f32 %v654, %v804
    %v825 = vmul.f32 %v655, %v804
    %v826 = vmul.f32 %v656, %v804
    %v827 = vmul.f32 %v657, %v804
    %v828 = vmul.f32 %v658, %v804
    %v829 = vmul.f32 %v659, %v804
    %v830 = vmul.f32 %v660, %v804
    %v831 = vmul.f32 %v661, %v804
    %v832 = vmul.f32 %v662, %v804
    %v833 = vmul.f32 %v663, %v804
    %v834 = vmul.f32 %v664, %v804
    %v835 = vmul.f32 %v631, %v804
    %v836 = vmul.f32 %v632, %v804
    %v837 = vadd.f32 %v769, %v805
    %v838 = vadd.f32 %v770, %v806
    %v839 = vadd.f32 %v771, %v807
    %v840 = vadd.f32 %v772, %v808
    %v841 = vadd.f32 %v773, %v809
    %v842 = vadd.f32 %v774, %v810
    %v843 = vadd.f32 %v775, %v811
    %v844 = vadd.f32 %v776, %v812
    %v845 = vadd.f32 %v777, %v813
    %v846 = vadd.f32 %v778, %v814
    %v847 = vadd.f32 %v779, %v815
    %v848 = vadd.f32 %v780, %v816
    %v849 = vadd.f32 %v781, %v817
    %v850 = vadd.f32 %v782, %v818
    %v851 = vadd.f32 %v783, %v819
    %v852 = vadd.f32 %v784, %v820
    %v853 = vadd.f32 %v785, %v821
    %v854 = vadd.f32 %v786, %v822
    %v855 = vadd.f32 %v787, %v823
    %v856 = vadd.f32 %v788, %v824
    %v857 = vadd.f32 %v789, %v825
    %v858 = vadd.f32 %v790, %v826
    %v859 = vadd.f32 %v791, %v827
    %v860 = vadd.f32 %v792, %v828
    %v861 = vadd.f32 %v793, %v829
    %v862 = vadd.f32 %v794, %v830
    %v863 = vadd.f32 %v795, %v831
    %v864 = vadd.f32 %v796, %v832
    %v865 = vadd.f32 %v797, %v833
    %v866 = vadd.f32 %v798, %v834
    %v867 = vadd.f32 %v799, %v835
    %v868 = vadd.f32 %v800, %v836
    %vm869 = vcmask 31744
    %v870 = vsel %vm869, %v837, 0.0
    %v871 = vsel %vm869, %v839, 0.0
    %v872 = vadd.f32 %v870, %v871
    %v873 = vsel %vm869, %v841, 0.0
    %v874 = vadd.f32 %v872, %v873
    %v875 = vsel %vm869, %v843, 0.0
    %v876 = vadd.f32 %v874, %v875
    %v877 = vsel %vm869, %v838, 0.0
    %v878 = vsel %vm869, %v840, 0.0
    %v879 = vadd.f32 %v877, %v878
    %v880 = vsel %vm869, %v842, 0.0
    %v881 = vadd.f32 %v879, %v880
    %v882 = vsel %vm869, %v844, 0.0
    %v883 = vadd.f32 %v881, %v882
    %v884 = vsel %vm869, %v845, 0.0
    %v885 = vsel %vm869, %v847, 0.0
    %v886 = vadd.f32 %v884, %v885
    %v887 = vsel %vm869, %v849, 0.0
    %v888 = vadd.f32 %v886, %v887
    %v889 = vsel %vm869, %v851, 0.0
    %v890 = vadd.f32 %v888, %v889
    %v891 = vsel %vm869, %v846, 0.0
    %v892 = vsel %vm869, %v848, 0.0
    %v893 = vadd.f32 %v891, %v892
    %v894 = vsel %vm869, %v850, 0.0
    %v895 = vadd.f32 %v893, %v894
    %v896 = vsel %vm869, %v852, 0.0
    %v897 = vadd.f32 %v895, %v896
    %v898 = vsel %vm869, %v853, 0.0
    %v899 = vsel %vm869, %v855, 0.0
    %v900 = vadd.f32 %v898, %v899
    %v901 = vsel %vm869, %v857, 0.0
    %v902 = vadd.f32 %v900, %v901
    %v903 = vsel %vm869, %v859, 0.0
    %v904 = vadd.f32 %v902, %v903
    %v905 = vsel %vm869, %v854, 0.0
    %v906 = vsel %vm869, %v856, 0.0
    %v907 = vadd.f32 %v905, %v906
    %v908 = vsel %vm869, %v858, 0.0
    %v909 = vadd.f32 %v907, %v908
    %v910 = vsel %vm869, %v860, 0.0
    %v911 = vadd.f32 %v909, %v910
    %v912 = vsel %vm869, %v861, 0.0
    %v913 = vsel %vm869, %v863, 0.0
    %v914 = vadd.f32 %v912, %v913
    %v915 = vsel %vm869, %v865, 0.0
    %v916 = vadd.f32 %v914, %v915
    %v917 = vsel %vm869, %v867, 0.0
    %v918 = vadd.f32 %v916, %v917
    %v919 = vsel %vm869, %v862, 0.0
    %v920 = vsel %vm869, %v864, 0.0
    %v921 = vadd.f32 %v919, %v920
    %v922 = vsel %vm869, %v866, 0.0
    %v923 = vadd.f32 %v921, %v922
    %v924 = vsel %vm869, %v868, 0.0
    %v925 = vadd.f32 %v923, %v924
    %vm926 = vcmask 27648
    %v927 = vsel %vm926, %v876, 0.0
    %v928 = vrot.slane %v927, 4
    %v929 = vadd.f32 %v927, %v928
    %v930 = vrot.slane %v929, 2
    %v931 = vadd.f32 %v929, %v930
    %v932 = vrot.slane %v931, 1
    %v933 = vadd.f32 %v931, %v932
    %v934 = vsel %vm926, %v890, 0.0
    %v935 = vrot.slane %v934, 4
    %v936 = vadd.f32 %v934, %v935
    %v937 = vrot.slane %v936, 2
    %v938 = vadd.f32 %v936, %v937
    %v939 = vrot.slane %v938, 1
    %v940 = vadd.f32 %v938, %v939
    %v941 = vsel %vm926, %v904, 0.0
    %v942 = vrot.slane %v941, 4
    %v943 = vadd.f32 %v941, %v942
    %v944 = vrot.slane %v943, 2
    %v945 = vadd.f32 %v943, %v944
    %v946 = vrot.slane %v945, 1
    %v947 = vadd.f32 %v945, %v946
    %v948 = vsel %vm926, %v918, 0.0
    %v949 = vrot.slane %v948, 4
    %v950 = vadd.f32 %v948, %v949
    %v951 = vrot.slane %v950, 2
    %v952 = vadd.f32 %v950, %v951
    %v953 = vrot.slane %v952, 1
    %v954 = vadd.f32 %v952, %v953
    %v959 = vrot.slane %v876, 4
    %v960 = vrot.slane %v890, 4
    %v961 = vrot.slane %v904, 4
    %v962 = vrot.slane %v918, 4
    %v967 = vsel %vm926, %v959, 0.0
    %v968 = vrot.slane %v967, 4
    %v969 = vadd.f32 %v967, %v968
    %v970 = vrot.slane %v969, 2
    %v971 = vadd.f32 %v969, %v970
    %v972 = vrot.slane %v971, 1
    %v973 = vadd.f32 %v971, %v972
    %v974 = vsel %vm926, %v960, 0.0
    %v975 = vrot.slane %v974, 4
    %v976 = vadd.f32 %v974, %v975
    %v977 = vrot.slane %v976, 2
    %v978 = vadd.f32 %v976, %v977
    %v979 = vrot.slane %v978, 1
    %v980 = vadd.f32 %v978, %v979
    %v981 = vsel %vm926, %v961, 0.0
    %v982 = vrot.slane %v981, 4
    %v983 = vadd.f32 %v981, %v982
    %v984 = vrot.slane %v983, 2
    %v985 = vadd.f32 %v983, %v984
    %v986 = vrot.slane %v985, 1
    %v987 = vadd.f32 %v985, %v986
    %v988 = vsel %vm926, %v962, 0.0
    %v989 = vrot.slane %v988, 4
    %v990 = vadd.f32 %v988, %v989
    %v991 = vrot.slane %v990, 2
    %v992 = vadd.f32 %v990, %v991
    %v993 = vrot.slane %v992, 1
    %v994 = vadd.f32 %v992, %v993
    %v995 = vsel %vm926, %v883, 0.0
    %v996 = vrot.slane %v995, 4
    %v997 = vadd.f32 %v995, %v996
    %v998 = vrot.slane %v997, 2
    %v999 = vadd.f32 %v997, %v998
    %v1000 = vrot.slane %v999, 1
    %v1001 = vadd.f32 %v999, %v1000
    %v1002 = vsel %vm926, %v897, 0.0
    %v1003 = vrot.slane %v1002, 4
    %v1004 = vadd.f32 %v1002, %v1003
    %v1005 = vrot.slane %v1004, 2
    %v1006 = vadd.f32 %v1004, %v1005
    %v1007 = vrot.slane %v1006, 1
    %v1008 = vadd.f32 %v1006, %v1007
    %v1009 = vsel %vm926, %v911, 0.0
    %v1010 = vrot.slane %v1009, 4
    %v1011 = vadd.f32 %v1009, %v1010
    %v1012 = vrot.slane %v1011, 2
    %v1013 = vadd.f32 %v1011, %v1012
    %v1014 = vrot.slane %v1013, 1
    %v1015 = vadd.f32 %v1013, %v1014
    %v1016 = vsel %vm926, %v925, 0.0
    %v1017 = vrot.slane %v1016, 4
    %v1018 = vadd.f32 %v1016, %v1017
    %v1019 = vrot.slane %v1018, 2
    %v1020 = vadd.f32 %v1018, %v1019
    %v1021 = vrot.slane %v1020, 1
    %v1022 = vadd.f32 %v1020, %v1021
    %v1027 = vrot.slane %v883, 4
    %v1028 = vrot.slane %v897, 4
    %v1029 = vrot.slane %v911, 4
    %v1030 = vrot.slane %v925, 4
    %v1035 = vsel %vm926, %v1027, 0.0
    %v1036 = vrot.slane %v1035, 4
    %v1037 = vadd.f32 %v1035, %v1036
    %v1038 = vrot.slane %v1037, 2
    %v1039 = vadd.f32 %v1037, %v1038
    %v1040 = vrot.slane %v1039, 1
    %v1041 = vadd.f32 %v1039, %v1040
    %v1042 = vsel %vm926, %v1028, 0.0
    %v1043 = vrot.slane %v1042, 4
    %v1044 = vadd.f32 %v1042, %v1043
    %v1045 = vrot.slane %v1044, 2
    %v1046 = vadd.f32 %v1044, %v1045
    %v1047 = vrot.slane %v1046, 1
    %v1048 = vadd.f32 %v1046, %v1047
    %v1049 = vsel %vm926, %v1029, 0.0
    %v1050 = vrot.slane %v1049, 4
    %v1051 = vadd.f32 %v1049, %v1050
    %v1052 = vrot.slane %v1051, 2
    %v1053 = vadd.f32 %v1051, %v1052
    %v1054 = vrot.slane %v1053, 1
    %v1055 = vadd.f32 %v1053, %v1054
    %v1056 = vsel %vm926, %v1030, 0.0
    %v1057 = vrot.slane %v1056, 4
    %v1058 = vadd.f32 %v1056, %v1057
    %v1059 = vrot.slane %v1058, 2
    %v1060 = vadd.f32 %v1058, %v1059
    %v1061 = vrot.slane %v1060, 1
    %v1062 = vadd.f32 %v1060, %v1061
    %vm1063 = vcmask 1040384
    %v1064 = vsel %vm1063, %v933, %v973
    %v1065 = vsel %vm1063, %v940, %v980
    %v1066 = vsel %vm1063, %v947, %v987
    %v1067 = vsel %vm1063, %v954, %v994
    %vm1068 = vcmask 1041408
    %v1069 = vsel %vm1068, %v1064, %v1001
    %v1070 = vsel %vm1068, %v1065, %v1008
    %v1071 = vsel %vm1068, %v1066, %v1015
    %v1072 = vsel %vm1068, %v1067, %v1022
    %vm1073 = vcmask 1042432
    %v1074 = vsel %vm1073, %v1069, %v1041
    %v1075 = vsel %vm1073, %v1070, %v1048
    %v1076 = vsel %vm1073, %v1071, %v1055
    %v1077 = vsel %vm1073, %v1072, %v1062
    %v1078 = vmul.f32 %v1074, 0.0625
    %v1079 = vmul.f32 %v1075, 0.0625
    %v1080 = vmul.f32 %v1076, 0.0625
    %v1081 = vmul.f32 %v1077, 0.0625
    %v1083 = vlaneseq
    %v1084 = vshrl.u32 %v1083, 7
    %v1085 = vsub.s32 0, %v1084
    %v1086 = vrot.slane %v17, %v1085
    %v1088 = vadd.f32 %v1078, %v1086
    %v1089 = vadd.f32 %v1079, %v1086
    %v1090 = vadd.f32 %v1080, %v1086
    %v1091 = vadd.f32 %v1081, %v1086
    %1092 = vst.msk [vmem:[#allocation2] sm:$0xf] %vm926, %v1088
    %1093 = vst.msk [vmem:[#allocation2 + $0x4] sm:$0xf] %vm926, %v1089
    %1094 = vst.msk [vmem:[#allocation2 + $0x8] sm:$0xf] %vm926, %v1090
    %1095 = vst.msk [vmem:[#allocation2 + $0xc] sm:$0xf] %vm926, %v1091
    %s1096 = scalar_lea.vmem %s0, 8
    %v1097 = vld [vmem:[%s1096] sm:$0xff]
    %v1099 = vcombine.high %v1097, %v1097
    %1101 = vxpose.xlu0.b32.start [1/16] %v1097, 128
    %1102 = vxpose.xlu0.b32.cont [2/16] 0.0, 128
    %1103 = vxpose.xlu0.b32.cont [3/16] 0.0, 128
    %1104 = vxpose.xlu0.b32.cont [4/16] 0.0, 128
    %1105 = vxpose.xlu0.b32.cont [5/16] 0.0, 128
    %1106 = vxpose.xlu0.b32.cont [6/16] 0.0, 128
    %1107 = vxpose.xlu0.b32.cont [7/16] 0.0, 128
    %1108 = vxpose.xlu0.b32.cont [8/16] 0.0, 128
    %1109 = vxpose.xlu0.b32.cont [9/16] 0.0, 128
    %1110 = vxpose.xlu0.b32.cont [10/16] 0.0, 128
    %1111 = vxpose.xlu0.b32.cont [11/16] 0.0, 128
    %1112 = vxpose.xlu0.b32.cont [12/16] 0.0, 128
    %1113 = vxpose.xlu0.b32.cont [13/16] 0.0, 128
    %1114 = vxpose.xlu0.b32.cont [14/16] 0.0, 128
    %1115 = vxpose.xlu0.b32.cont [15/16] 0.0, 128
    %1116 = vxpose.xlu0.b32.end [16/16] 0.0, 128
    %v1117 = vpop.trf.xlu0
    %v1118 = vpop.trf.xlu0
    %v1119 = vpop.trf.xlu0
    %v1120 = vpop.trf.xlu0
    %v1121 = vpop.trf.xlu0
    %v1122 = vpop.trf.xlu0
    %v1123 = vpop.trf.xlu0
    %v1124 = vpop.trf.xlu0
    %v1125 = vpop.trf.xlu0
    %v1126 = vpop.trf.xlu0
    %v1127 = vpop.trf.xlu0
    %v1128 = vpop.trf.xlu0
    %v1129 = vpop.trf.xlu0
    %v1130 = vpop.trf.xlu0
    %v1131 = vpop.trf.xlu0
    %v1132 = vpop.trf.xlu0
    %1133 = vxpose.xlu0.b32.start [1/16] %v1099, 128
    %1134 = vxpose.xlu0.b32.cont [2/16] 0.0, 128
    %1135 = vxpose.xlu0.b32.cont [3/16] 0.0, 128
    %1136 = vxpose.xlu0.b32.cont [4/16] 0.0, 128
    %1137 = vxpose.xlu0.b32.cont [5/16] 0.0, 128
    %1138 = vxpose.xlu0.b32.cont [6/16] 0.0, 128
    %1139 = vxpose.xlu0.b32.cont [7/16] 0.0, 128
    %1140 = vxpose.xlu0.b32.cont [8/16] 0.0, 128
    %1141 = vxpose.xlu0.b32.cont [9/16] 0.0, 128
    %1142 = vxpose.xlu0.b32.cont [10/16] 0.0, 128
    %1143 = vxpose.xlu0.b32.cont [11/16] 0.0, 128
    %1144 = vxpose.xlu0.b32.cont [12/16] 0.0, 128
    %1145 = vxpose.xlu0.b32.cont [13/16] 0.0, 128
    %1146 = vxpose.xlu0.b32.cont [14/16] 0.0, 128
    %1147 = vxpose.xlu0.b32.cont [15/16] 0.0, 128
    %1148 = vxpose.xlu0.b32.end [16/16] 0.0, 128
    %v1149 = vpop.trf.xlu0
    %v1150 = vpop.trf.xlu0
    %v1151 = vpop.trf.xlu0
    %v1152 = vpop.trf.xlu0
    %v1153 = vpop.trf.xlu0
    %v1154 = vpop.trf.xlu0
    %v1155 = vpop.trf.xlu0
    %v1156 = vpop.trf.xlu0
    %v1157 = vpop.trf.xlu0
    %v1158 = vpop.trf.xlu0
    %v1159 = vpop.trf.xlu0
    %v1160 = vpop.trf.xlu0
    %v1161 = vpop.trf.xlu0
    %v1162 = vpop.trf.xlu0
    %v1163 = vpop.trf.xlu0
    %v1164 = vpop.trf.xlu0
    %v1165 = vrot.slane %v1117, 7
    %v1166 = vrot.slane %v1119, 7
    %v1167 = vrot.slane %v1121, 7
    %v1168 = vrot.slane %v1123, 7
    %v1169 = vrot.slane %v1125, 7
    %v1170 = vrot.slane %v1127, 7
    %v1171 = vrot.slane %v1129, 7
    %v1172 = vrot.slane %v1131, 7
    %v1173 = vrot.slane %v1149, 7
    %v1174 = vrot.slane %v1151, 7
    %v1175 = vrot.slane %v1153, 7
    %v1176 = vrot.slane %v1155, 7
    %v1177 = vrot.slane %v1157, 7
    %v1178 = vrot.slane %v1159, 7
    %v1179 = vrot.slane %v1161, 7
    %v1180 = vrot.slane %v1163, 7
    %v1181 = vrot.slane %v1118, 7
    %v1182 = vrot.slane %v1120, 7
    %v1183 = vrot.slane %v1122, 7
    %v1184 = vrot.slane %v1124, 7
    %v1185 = vrot.slane %v1126, 7
    %v1186 = vrot.slane %v1128, 7
    %v1187 = vrot.slane %v1130, 7
    %v1188 = vrot.slane %v1132, 7
    %v1189 = vrot.slane %v1150, 7
    %v1190 = vrot.slane %v1152, 7
    %v1191 = vrot.slane %v1154, 7
    %v1192 = vrot.slane %v1156, 7
    %v1193 = vrot.slane %v1158, 7
    %v1194 = vrot.slane %v1160, 7
    %v1195 = vrot.slane %v1162, 7
    %v1196 = vrot.slane %v1164, 7
    %v1197 = vsel %vm125, %v1165, %v1181
    %v1198 = vsel %vm125, %v1166, %v1182
    %v1199 = vsel %vm125, %v1167, %v1183
    %v1200 = vsel %vm125, %v1168, %v1184
    %v1201 = vsel %vm125, %v1169, %v1185
    %v1202 = vsel %vm125, %v1170, %v1186
    %v1203 = vsel %vm125, %v1171, %v1187
    %v1204 = vsel %vm125, %v1172, %v1188
    %v1205 = vsel %vm125, %v1173, %v1189
    %v1206 = vsel %vm125, %v1174, %v1190
    %v1207 = vsel %vm125, %v1175, %v1191
    %v1208 = vsel %vm125, %v1176, %v1192
    %v1209 = vsel %vm125, %v1177, %v1193
    %v1210 = vsel %vm125, %v1178, %v1194
    %v1211 = vsel %vm125, %v1179, %v1195
    %v1212 = vsel %vm125, %v1180, %v1196
    %v1213 = vsel %vm125, %v1181, %v1165
    %v1214 = vsel %vm125, %v1182, %v1166
    %v1215 = vsel %vm125, %v1183, %v1167
    %v1216 = vsel %vm125, %v1184, %v1168
    %v1217 = vsel %vm125, %v1185, %v1169
    %v1218 = vsel %vm125, %v1186, %v1170
    %v1219 = vsel %vm125, %v1187, %v1171
    %v1220 = vsel %vm125, %v1188, %v1172
    %v1221 = vsel %vm125, %v1189, %v1173
    %v1222 = vsel %vm125, %v1190, %v1174
    %v1223 = vsel %vm125, %v1191, %v1175
    %v1224 = vsel %vm125, %v1192, %v1176
    %v1225 = vsel %vm125, %v1193, %v1177
    %v1226 = vsel %vm125, %v1194, %v1178
    %v1227 = vsel %vm125, %v1195, %v1179
    %v1228 = vsel %vm125, %v1196, %v1180
    %v1229 = vsel %vm21, %v1213, 0.0
    %v1230 = vsel %vm22, %v1197, 0.0
    %v1231 = vsel %vm21, %v1214, 0.0
    %v1232 = vsel %vm22, %v1198, 0.0
    %v1233 = vsel %vm21, %v1215, 0.0
    %v1234 = vsel %vm22, %v1199, 0.0
    %v1235 = vsel %vm21, %v1216, 0.0
    %v1236 = vsel %vm22, %v1200, 0.0
    %v1237 = vsel %vm21, %v1217, 0.0
    %v1238 = vsel %vm22, %v1201, 0.0
    %v1239 = vsel %vm21, %v1218, 0.0
    %v1240 = vsel %vm22, %v1202, 0.0
    %v1241 = vsel %vm21, %v1219, 0.0
    %v1242 = vsel %vm22, %v1203, 0.0
    %v1243 = vsel %vm21, %v1220, 0.0
    %v1244 = vsel %vm22, %v1204, 0.0
    %v1245 = vsel %vm21, %v1221, 0.0
    %v1246 = vsel %vm22, %v1205, 0.0
    %v1247 = vsel %vm21, %v1222, 0.0
    %v1248 = vsel %vm22, %v1206, 0.0
    %v1249 = vsel %vm21, %v1223, 0.0
    %v1250 = vsel %vm22, %v1207, 0.0
    %v1251 = vsel %vm21, %v1224, 0.0
    %v1252 = vsel %vm22, %v1208, 0.0
    %v1253 = vsel %vm21, %v1225, 0.0
    %v1254 = vsel %vm22, %v1209, 0.0
    %v1255 = vsel %vm21, %v1226, 0.0
    %v1256 = vsel %vm22, %v1210, 0.0
    %v1257 = vsel %vm21, %v1227, 0.0
    %v1258 = vsel %vm22, %v1211, 0.0
    %v1259 = vsel %vm21, %v1228, 0.0
    %v1260 = vsel %vm22, %v1212, 0.0
    %v1261 = vmul.f32 %v1229, %v195
    %v1262 = vmul.f32 %v1230, %v195
    %v1263 = vmul.f32 %v1231, %v195
    %v1264 = vmul.f32 %v1232, %v195
    %v1265 = vmul.f32 %v1233, %v195
    %v1266 = vmul.f32 %v1234, %v195
    %v1267 = vmul.f32 %v1235, %v195
    %v1268 = vmul.f32 %v1236, %v195
    %v1269 = vmul.f32 %v1237, %v195
    %v1270 = vmul.f32 %v1238, %v195
    %v1271 = vmul.f32 %v1239, %v195
    %v1272 = vmul.f32 %v1240, %v195
    %v1273 = vmul.f32 %v1241, %v195
    %v1274 = vmul.f32 %v1242, %v195
    %v1275 = vmul.f32 %v1243, %v195
    %v1276 = vmul.f32 %v1244, %v195
    %v1277 = vmul.f32 %v1245, %v195
    %v1278 = vmul.f32 %v1246, %v195
    %v1279 = vmul.f32 %v1247, %v195
    %v1280 = vmul.f32 %v1248, %v195
    %v1281 = vmul.f32 %v1249, %v195
    %v1282 = vmul.f32 %v1250, %v195
    %v1283 = vmul.f32 %v1251, %v195
    %v1284 = vmul.f32 %v1252, %v195
    %v1285 = vmul.f32 %v1253, %v195
    %v1286 = vmul.f32 %v1254, %v195
    %v1287 = vmul.f32 %v1255, %v195
    %v1288 = vmul.f32 %v1256, %v195
    %v1289 = vmul.f32 %v1257, %v195
    %v1290 = vmul.f32 %v1258, %v195
    %v1291 = vmul.f32 %v1229, %v231
    %v1292 = vmul.f32 %v1230, %v231
    %v1293 = vmul.f32 %v1231, %v231
    %v1294 = vmul.f32 %v1232, %v231
    %v1295 = vmul.f32 %v1233, %v231
    %v1296 = vmul.f32 %v1234, %v231
    %v1297 = vmul.f32 %v1235, %v231
    %v1298 = vmul.f32 %v1236, %v231
    %v1299 = vmul.f32 %v1237, %v231
    %v1300 = vmul.f32 %v1238, %v231
    %v1301 = vmul.f32 %v1239, %v231
    %v1302 = vmul.f32 %v1240, %v231
    %v1303 = vmul.f32 %v1241, %v231
    %v1304 = vmul.f32 %v1242, %v231
    %v1305 = vmul.f32 %v1243, %v231
    %v1306 = vmul.f32 %v1244, %v231
    %v1307 = vmul.f32 %v1245, %v231
    %v1308 = vmul.f32 %v1246, %v231
    %v1309 = vmul.f32 %v1247, %v231
    %v1310 = vmul.f32 %v1248, %v231
    %v1311 = vmul.f32 %v1249, %v231
    %v1312 = vmul.f32 %v1250, %v231
    %v1313 = vmul.f32 %v1251, %v231
    %v1314 = vmul.f32 %v1252, %v231
    %v1315 = vmul.f32 %v1253, %v231
    %v1316 = vmul.f32 %v1254, %v231
    %v1317 = vmul.f32 %v1255, %v231
    %v1318 = vmul.f32 %v1256, %v231
    %v1319 = vmul.f32 %v1257, %v231
    %v1320 = vmul.f32 %v1258, %v231
    %v1321 = vmul.f32 %v1259, %v231
    %v1322 = vmul.f32 %v1260, %v231
    %v1323 = vadd.f32 %v196, %v1291
    %v1324 = vadd.f32 %v197, %v1292
    %v1325 = vadd.f32 %v1261, %v1293
    %v1326 = vadd.f32 %v1262, %v1294
    %v1327 = vadd.f32 %v1263, %v1295
    %v1328 = vadd.f32 %v1264, %v1296
    %v1329 = vadd.f32 %v1265, %v1297
    %v1330 = vadd.f32 %v1266, %v1298
    %v1331 = vadd.f32 %v1267, %v1299
    %v1332 = vadd.f32 %v1268, %v1300
    %v1333 = vadd.f32 %v1269, %v1301
    %v1334 = vadd.f32 %v1270, %v1302
    %v1335 = vadd.f32 %v1271, %v1303
    %v1336 = vadd.f32 %v1272, %v1304
    %v1337 = vadd.f32 %v1273, %v1305
    %v1338 = vadd.f32 %v1274, %v1306
    %v1339 = vadd.f32 %v1275, %v1307
    %v1340 = vadd.f32 %v1276, %v1308
    %v1341 = vadd.f32 %v1277, %v1309
    %v1342 = vadd.f32 %v1278, %v1310
    %v1343 = vadd.f32 %v1279, %v1311
    %v1344 = vadd.f32 %v1280, %v1312
    %v1345 = vadd.f32 %v1281, %v1313
    %v1346 = vadd.f32 %v1282, %v1314
    %v1347 = vadd.f32 %v1283, %v1315
    %v1348 = vadd.f32 %v1284, %v1316
    %v1349 = vadd.f32 %v1285, %v1317
    %v1350 = vadd.f32 %v1286, %v1318
    %v1351 = vadd.f32 %v1287, %v1319
    %v1352 = vadd.f32 %v1288, %v1320
    %v1353 = vadd.f32 %v1289, %v1321
    %v1354 = vadd.f32 %v1290, %v1322
    %v1355 = vmul.f32 %v1231, %v299
    %v1356 = vmul.f32 %v1232, %v299
    %v1357 = vmul.f32 %v1233, %v299
    %v1358 = vmul.f32 %v1234, %v299
    %v1359 = vmul.f32 %v1235, %v299
    %v1360 = vmul.f32 %v1236, %v299
    %v1361 = vmul.f32 %v1237, %v299
    %v1362 = vmul.f32 %v1238, %v299
    %v1363 = vmul.f32 %v1239, %v299
    %v1364 = vmul.f32 %v1240, %v299
    %v1365 = vmul.f32 %v1241, %v299
    %v1366 = vmul.f32 %v1242, %v299
    %v1367 = vmul.f32 %v1243, %v299
    %v1368 = vmul.f32 %v1244, %v299
    %v1369 = vmul.f32 %v1245, %v299
    %v1370 = vmul.f32 %v1246, %v299
    %v1371 = vmul.f32 %v1247, %v299
    %v1372 = vmul.f32 %v1248, %v299
    %v1373 = vmul.f32 %v1249, %v299
    %v1374 = vmul.f32 %v1250, %v299
    %v1375 = vmul.f32 %v1251, %v299
    %v1376 = vmul.f32 %v1252, %v299
    %v1377 = vmul.f32 %v1253, %v299
    %v1378 = vmul.f32 %v1254, %v299
    %v1379 = vmul.f32 %v1255, %v299
    %v1380 = vmul.f32 %v1256, %v299
    %v1381 = vmul.f32 %v1257, %v299
    %v1382 = vmul.f32 %v1258, %v299
    %v1383 = vmul.f32 %v1259, %v299
    %v1384 = vmul.f32 %v1260, %v299
    %v1385 = vadd.f32 %v1323, %v1355
    %v1386 = vadd.f32 %v1324, %v1356
    %v1387 = vadd.f32 %v1325, %v1357
    %v1388 = vadd.f32 %v1326, %v1358
    %v1389 = vadd.f32 %v1327, %v1359
    %v1390 = vadd.f32 %v1328, %v1360
    %v1391 = vadd.f32 %v1329, %v1361
    %v1392 = vadd.f32 %v1330, %v1362
    %v1393 = vadd.f32 %v1331, %v1363
    %v1394 = vadd.f32 %v1332, %v1364
    %v1395 = vadd.f32 %v1333, %v1365
    %v1396 = vadd.f32 %v1334, %v1366
    %v1397 = vadd.f32 %v1335, %v1367
    %v1398 = vadd.f32 %v1336, %v1368
    %v1399 = vadd.f32 %v1337, %v1369
    %v1400 = vadd.f32 %v1338, %v1370
    %v1401 = vadd.f32 %v1339, %v1371
    %v1402 = vadd.f32 %v1340, %v1372
    %v1403 = vadd.f32 %v1341, %v1373
    %v1404 = vadd.f32 %v1342, %v1374
    %v1405 = vadd.f32 %v1343, %v1375
    %v1406 = vadd.f32 %v1344, %v1376
    %v1407 = vadd.f32 %v1345, %v1377
    %v1408 = vadd.f32 %v1346, %v1378
    %v1409 = vadd.f32 %v1347, %v1379
    %v1410 = vadd.f32 %v1348, %v1380
    %v1411 = vadd.f32 %v1349, %v1381
    %v1412 = vadd.f32 %v1350, %v1382
    %v1413 = vadd.f32 %v1351, %v1383
    %v1414 = vadd.f32 %v1352, %v1384
    %v1415 = vadd.f32 %v1353, %v330
    %v1416 = vadd.f32 %v1354, %v331
    %v1417 = vmul.f32 %v1117, %v367
    %v1418 = vmul.f32 %v1118, %v367
    %v1419 = vmul.f32 %v1119, %v367
    %v1420 = vmul.f32 %v1120, %v367
    %v1421 = vmul.f32 %v1121, %v367
    %v1422 = vmul.f32 %v1122, %v367
    %v1423 = vmul.f32 %v1123, %v367
    %v1424 = vmul.f32 %v1124, %v367
    %v1425 = vmul.f32 %v1125, %v367
    %v1426 = vmul.f32 %v1126, %v367
    %v1427 = vmul.f32 %v1127, %v367
    %v1428 = vmul.f32 %v1128, %v367
    %v1429 = vmul.f32 %v1129, %v367
    %v1430 = vmul.f32 %v1130, %v367
    %v1431 = vmul.f32 %v1131, %v367
    %v1432 = vmul.f32 %v1132, %v367
    %v1433 = vmul.f32 %v1149, %v367
    %v1434 = vmul.f32 %v1150, %v367
    %v1435 = vmul.f32 %v1151, %v367
    %v1436 = vmul.f32 %v1152, %v367
    %v1437 = vmul.f32 %v1153, %v367
    %v1438 = vmul.f32 %v1154, %v367
    %v1439 = vmul.f32 %v1155, %v367
    %v1440 = vmul.f32 %v1156, %v367
    %v1441 = vmul.f32 %v1157, %v367
    %v1442 = vmul.f32 %v1158, %v367
    %v1443 = vmul.f32 %v1159, %v367
    %v1444 = vmul.f32 %v1160, %v367
    %v1445 = vmul.f32 %v1161, %v367
    %v1446 = vmul.f32 %v1162, %v367
    %v1447 = vadd.f32 %v1385, %v368
    %v1448 = vadd.f32 %v1386, %v368
    %v1449 = vadd.f32 %v1387, %v1417
    %v1450 = vadd.f32 %v1388, %v1418
    %v1451 = vadd.f32 %v1389, %v1419
    %v1452 = vadd.f32 %v1390, %v1420
    %v1453 = vadd.f32 %v1391, %v1421
    %v1454 = vadd.f32 %v1392, %v1422
    %v1455 = vadd.f32 %v1393, %v1423
    %v1456 = vadd.f32 %v1394, %v1424
    %v1457 = vadd.f32 %v1395, %v1425
    %v1458 = vadd.f32 %v1396, %v1426
    %v1459 = vadd.f32 %v1397, %v1427
    %v1460 = vadd.f32 %v1398, %v1428
    %v1461 = vadd.f32 %v1399, %v1429
    %v1462 = vadd.f32 %v1400, %v1430
    %v1463 = vadd.f32 %v1401, %v1431
    %v1464 = vadd.f32 %v1402, %v1432
    %v1465 = vadd.f32 %v1403, %v1433
    %v1466 = vadd.f32 %v1404, %v1434
    %v1467 = vadd.f32 %v1405, %v1435
    %v1468 = vadd.f32 %v1406, %v1436
    %v1469 = vadd.f32 %v1407, %v1437
    %v1470 = vadd.f32 %v1408, %v1438
    %v1471 = vadd.f32 %v1409, %v1439
    %v1472 = vadd.f32 %v1410, %v1440
    %v1473 = vadd.f32 %v1411, %v1441
    %v1474 = vadd.f32 %v1412, %v1442
    %v1475 = vadd.f32 %v1413, %v1443
    %v1476 = vadd.f32 %v1414, %v1444
    %v1477 = vadd.f32 %v1415, %v1445
    %v1478 = vadd.f32 %v1416, %v1446
    %v1479 = vmul.f32 %v1117, %v434
    %v1480 = vmul.f32 %v1118, %v434
    %v1481 = vmul.f32 %v1119, %v434
    %v1482 = vmul.f32 %v1120, %v434
    %v1483 = vmul.f32 %v1121, %v434
    %v1484 = vmul.f32 %v1122, %v434
    %v1485 = vmul.f32 %v1123, %v434
    %v1486 = vmul.f32 %v1124, %v434
    %v1487 = vmul.f32 %v1125, %v434
    %v1488 = vmul.f32 %v1126, %v434
    %v1489 = vmul.f32 %v1127, %v434
    %v1490 = vmul.f32 %v1128, %v434
    %v1491 = vmul.f32 %v1129, %v434
    %v1492 = vmul.f32 %v1130, %v434
    %v1493 = vmul.f32 %v1131, %v434
    %v1494 = vmul.f32 %v1132, %v434
    %v1495 = vmul.f32 %v1149, %v434
    %v1496 = vmul.f32 %v1150, %v434
    %v1497 = vmul.f32 %v1151, %v434
    %v1498 = vmul.f32 %v1152, %v434
    %v1499 = vmul.f32 %v1153, %v434
    %v1500 = vmul.f32 %v1154, %v434
    %v1501 = vmul.f32 %v1155, %v434
    %v1502 = vmul.f32 %v1156, %v434
    %v1503 = vmul.f32 %v1157, %v434
    %v1504 = vmul.f32 %v1158, %v434
    %v1505 = vmul.f32 %v1159, %v434
    %v1506 = vmul.f32 %v1160, %v434
    %v1507 = vmul.f32 %v1161, %v434
    %v1508 = vmul.f32 %v1162, %v434
    %v1509 = vmul.f32 %v1163, %v434
    %v1510 = vmul.f32 %v1164, %v434
    %v1511 = vadd.f32 %v1447, %v1479
    %v1512 = vadd.f32 %v1448, %v1480
    %v1513 = vadd.f32 %v1449, %v1481
    %v1514 = vadd.f32 %v1450, %v1482
    %v1515 = vadd.f32 %v1451, %v1483
    %v1516 = vadd.f32 %v1452, %v1484
    %v1517 = vadd.f32 %v1453, %v1485
    %v1518 = vadd.f32 %v1454, %v1486
    %v1519 = vadd.f32 %v1455, %v1487
    %v1520 = vadd.f32 %v1456, %v1488
    %v1521 = vadd.f32 %v1457, %v1489
    %v1522 = vadd.f32 %v1458, %v1490
    %v1523 = vadd.f32 %v1459, %v1491
    %v1524 = vadd.f32 %v1460, %v1492
    %v1525 = vadd.f32 %v1461, %v1493
    %v1526 = vadd.f32 %v1462, %v1494
    %v1527 = vadd.f32 %v1463, %v1495
    %v1528 = vadd.f32 %v1464, %v1496
    %v1529 = vadd.f32 %v1465, %v1497
    %v1530 = vadd.f32 %v1466, %v1498
    %v1531 = vadd.f32 %v1467, %v1499
    %v1532 = vadd.f32 %v1468, %v1500
    %v1533 = vadd.f32 %v1469, %v1501
    %v1534 = vadd.f32 %v1470, %v1502
    %v1535 = vadd.f32 %v1471, %v1503
    %v1536 = vadd.f32 %v1472, %v1504
    %v1537 = vadd.f32 %v1473, %v1505
    %v1538 = vadd.f32 %v1474, %v1506
    %v1539 = vadd.f32 %v1475, %v1507
    %v1540 = vadd.f32 %v1476, %v1508
    %v1541 = vadd.f32 %v1477, %v1509
    %v1542 = vadd.f32 %v1478, %v1510
    %v1543 = vmul.f32 %v1119, %v502
    %v1544 = vmul.f32 %v1120, %v502
    %v1545 = vmul.f32 %v1121, %v502
    %v1546 = vmul.f32 %v1122, %v502
    %v1547 = vmul.f32 %v1123, %v502
    %v1548 = vmul.f32 %v1124, %v502
    %v1549 = vmul.f32 %v1125, %v502
    %v1550 = vmul.f32 %v1126, %v502
    %v1551 = vmul.f32 %v1127, %v502
    %v1552 = vmul.f32 %v1128, %v502
    %v1553 = vmul.f32 %v1129, %v502
    %v1554 = vmul.f32 %v1130, %v502
    %v1555 = vmul.f32 %v1131, %v502
    %v1556 = vmul.f32 %v1132, %v502
    %v1557 = vmul.f32 %v1149, %v502
    %v1558 = vmul.f32 %v1150, %v502
    %v1559 = vmul.f32 %v1151, %v502
    %v1560 = vmul.f32 %v1152, %v502
    %v1561 = vmul.f32 %v1153, %v502
    %v1562 = vmul.f32 %v1154, %v502
    %v1563 = vmul.f32 %v1155, %v502
    %v1564 = vmul.f32 %v1156, %v502
    %v1565 = vmul.f32 %v1157, %v502
    %v1566 = vmul.f32 %v1158, %v502
    %v1567 = vmul.f32 %v1159, %v502
    %v1568 = vmul.f32 %v1160, %v502
    %v1569 = vmul.f32 %v1161, %v502
    %v1570 = vmul.f32 %v1162, %v502
    %v1571 = vmul.f32 %v1163, %v502
    %v1572 = vmul.f32 %v1164, %v502
    %v1573 = vadd.f32 %v1511, %v1543
    %v1574 = vadd.f32 %v1512, %v1544
    %v1575 = vadd.f32 %v1513, %v1545
    %v1576 = vadd.f32 %v1514, %v1546
    %v1577 = vadd.f32 %v1515, %v1547
    %v1578 = vadd.f32 %v1516, %v1548
    %v1579 = vadd.f32 %v1517, %v1549
    %v1580 = vadd.f32 %v1518, %v1550
    %v1581 = vadd.f32 %v1519, %v1551
    %v1582 = vadd.f32 %v1520, %v1552
    %v1583 = vadd.f32 %v1521, %v1553
    %v1584 = vadd.f32 %v1522, %v1554
    %v1585 = vadd.f32 %v1523, %v1555
    %v1586 = vadd.f32 %v1524, %v1556
    %v1587 = vadd.f32 %v1525, %v1557
    %v1588 = vadd.f32 %v1526, %v1558
    %v1589 = vadd.f32 %v1527, %v1559
    %v1590 = vadd.f32 %v1528, %v1560
    %v1591 = vadd.f32 %v1529, %v1561
    %v1592 = vadd.f32 %v1530, %v1562
    %v1593 = vadd.f32 %v1531, %v1563
    %v1594 = vadd.f32 %v1532, %v1564
    %v1595 = vadd.f32 %v1533, %v1565
    %v1596 = vadd.f32 %v1534, %v1566
    %v1597 = vadd.f32 %v1535, %v1567
    %v1598 = vadd.f32 %v1536, %v1568
    %v1599 = vadd.f32 %v1537, %v1569
    %v1600 = vadd.f32 %v1538, %v1570
    %v1601 = vadd.f32 %v1539, %v1571
    %v1602 = vadd.f32 %v1540, %v1572
    %v1603 = vadd.f32 %v1541, %v533
    %v1604 = vadd.f32 %v1542, %v533
    %v1605 = vrot.slane %v1117, 1
    %v1606 = vrot.slane %v1119, 1
    %v1607 = vrot.slane %v1121, 1
    %v1608 = vrot.slane %v1123, 1
    %v1609 = vrot.slane %v1125, 1
    %v1610 = vrot.slane %v1127, 1
    %v1611 = vrot.slane %v1129, 1
    %v1612 = vrot.slane %v1131, 1
    %v1613 = vrot.slane %v1149, 1
    %v1614 = vrot.slane %v1151, 1
    %v1615 = vrot.slane %v1153, 1
    %v1616 = vrot.slane %v1155, 1
    %v1617 = vrot.slane %v1157, 1
    %v1618 = vrot.slane %v1159, 1
    %v1619 = vrot.slane %v1161, 1
    %v1620 = vrot.slane %v1163, 1
    %v1621 = vrot.slane %v1118, 1
    %v1622 = vrot.slane %v1120, 1
    %v1623 = vrot.slane %v1122, 1
    %v1624 = vrot.slane %v1124, 1
    %v1625 = vrot.slane %v1126, 1
    %v1626 = vrot.slane %v1128, 1
    %v1627 = vrot.slane %v1130, 1
    %v1628 = vrot.slane %v1132, 1
    %v1629 = vrot.slane %v1150, 1
    %v1630 = vrot.slane %v1152, 1
    %v1631 = vrot.slane %v1154, 1
    %v1632 = vrot.slane %v1156, 1
    %v1633 = vrot.slane %v1158, 1
    %v1634 = vrot.slane %v1160, 1
    %v1635 = vrot.slane %v1162, 1
    %v1636 = vrot.slane %v1164, 1
    %v1637 = vsel %vm598, %v1605, %v1621
    %v1638 = vsel %vm598, %v1606, %v1622
    %v1639 = vsel %vm598, %v1607, %v1623
    %v1640 = vsel %vm598, %v1608, %v1624
    %v1641 = vsel %vm598, %v1609, %v1625
    %v1642 = vsel %vm598, %v1610, %v1626
    %v1643 = vsel %vm598, %v1611, %v1627
    %v1644 = vsel %vm598, %v1612, %v1628
    %v1645 = vsel %vm598, %v1613, %v1629
    %v1646 = vsel %vm598, %v1614, %v1630
    %v1647 = vsel %vm598, %v1615, %v1631
    %v1648 = vsel %vm598, %v1616, %v1632
    %v1649 = vsel %vm598, %v1617, %v1633
    %v1650 = vsel %vm598, %v1618, %v1634
    %v1651 = vsel %vm598, %v1619, %v1635
    %v1652 = vsel %vm598, %v1620, %v1636
    %v1653 = vsel %vm598, %v1621, %v1605
    %v1654 = vsel %vm598, %v1622, %v1606
    %v1655 = vsel %vm598, %v1623, %v1607
    %v1656 = vsel %vm598, %v1624, %v1608
    %v1657 = vsel %vm598, %v1625, %v1609
    %v1658 = vsel %vm598, %v1626, %v1610
    %v1659 = vsel %vm598, %v1627, %v1611
    %v1660 = vsel %vm598, %v1628, %v1612
    %v1661 = vsel %vm598, %v1629, %v1613
    %v1662 = vsel %vm598, %v1630, %v1614
    %v1663 = vsel %vm598, %v1631, %v1615
    %v1664 = vsel %vm598, %v1632, %v1616
    %v1665 = vsel %vm598, %v1633, %v1617
    %v1666 = vsel %vm598, %v1634, %v1618
    %v1667 = vsel %vm598, %v1635, %v1619
    %v1668 = vsel %vm598, %v1636, %v1620
    %v1669 = vsel %vm23, %v1637, 0.0
    %v1670 = vsel %vm24, %v1653, 0.0
    %v1671 = vsel %vm23, %v1638, 0.0
    %v1672 = vsel %vm24, %v1654, 0.0
    %v1673 = vsel %vm23, %v1639, 0.0
    %v1674 = vsel %vm24, %v1655, 0.0
    %v1675 = vsel %vm23, %v1640, 0.0
    %v1676 = vsel %vm24, %v1656, 0.0
    %v1677 = vsel %vm23, %v1641, 0.0
    %v1678 = vsel %vm24, %v1657, 0.0
    %v1679 = vsel %vm23, %v1642, 0.0
    %v1680 = vsel %vm24, %v1658, 0.0
    %v1681 = vsel %vm23, %v1643, 0.0
    %v1682 = vsel %vm24, %v1659, 0.0
    %v1683 = vsel %vm23, %v1644, 0.0
    %v1684 = vsel %vm24, %v1660, 0.0
    %v1685 = vsel %vm23, %v1645, 0.0
    %v1686 = vsel %vm24, %v1661, 0.0
    %v1687 = vsel %vm23, %v1646, 0.0
    %v1688 = vsel %vm24, %v1662, 0.0
    %v1689 = vsel %vm23, %v1647, 0.0
    %v1690 = vsel %vm24, %v1663, 0.0
    %v1691 = vsel %vm23, %v1648, 0.0
    %v1692 = vsel %vm24, %v1664, 0.0
    %v1693 = vsel %vm23, %v1649, 0.0
    %v1694 = vsel %vm24, %v1665, 0.0
    %v1695 = vsel %vm23, %v1650, 0.0
    %v1696 = vsel %vm24, %v1666, 0.0
    %v1697 = vsel %vm23, %v1651, 0.0
    %v1698 = vsel %vm24, %v1667, 0.0
    %v1699 = vsel %vm23, %v1652, 0.0
    %v1700 = vsel %vm24, %v1668, 0.0
    %v1701 = vmul.f32 %v1669, %v668
    %v1702 = vmul.f32 %v1670, %v668
    %v1703 = vmul.f32 %v1671, %v668
    %v1704 = vmul.f32 %v1672, %v668
    %v1705 = vmul.f32 %v1673, %v668
    %v1706 = vmul.f32 %v1674, %v668
    %v1707 = vmul.f32 %v1675, %v668
    %v1708 = vmul.f32 %v1676, %v668
    %v1709 = vmul.f32 %v1677, %v668
    %v1710 = vmul.f32 %v1678, %v668
    %v1711 = vmul.f32 %v1679, %v668
    %v1712 = vmul.f32 %v1680, %v668
    %v1713 = vmul.f32 %v1681, %v668
    %v1714 = vmul.f32 %v1682, %v668
    %v1715 = vmul.f32 %v1683, %v668
    %v1716 = vmul.f32 %v1684, %v668
    %v1717 = vmul.f32 %v1685, %v668
    %v1718 = vmul.f32 %v1686, %v668
    %v1719 = vmul.f32 %v1687, %v668
    %v1720 = vmul.f32 %v1688, %v668
    %v1721 = vmul.f32 %v1689, %v668
    %v1722 = vmul.f32 %v1690, %v668
    %v1723 = vmul.f32 %v1691, %v668
    %v1724 = vmul.f32 %v1692, %v668
    %v1725 = vmul.f32 %v1693, %v668
    %v1726 = vmul.f32 %v1694, %v668
    %v1727 = vmul.f32 %v1695, %v668
    %v1728 = vmul.f32 %v1696, %v668
    %v1729 = vmul.f32 %v1697, %v668
    %v1730 = vmul.f32 %v1698, %v668
    %v1731 = vadd.f32 %v1573, %v669
    %v1732 = vadd.f32 %v1574, %v670
    %v1733 = vadd.f32 %v1575, %v1701
    %v1734 = vadd.f32 %v1576, %v1702
    %v1735 = vadd.f32 %v1577, %v1703
    %v1736 = vadd.f32 %v1578, %v1704
    %v1737 = vadd.f32 %v1579, %v1705
    %v1738 = vadd.f32 %v1580, %v1706
    %v1739 = vadd.f32 %v1581, %v1707
    %v1740 = vadd.f32 %v1582, %v1708
    %v1741 = vadd.f32 %v1583, %v1709
    %v1742 = vadd.f32 %v1584, %v1710
    %v1743 = vadd.f32 %v1585, %v1711
    %v1744 = vadd.f32 %v1586, %v1712
    %v1745 = vadd.f32 %v1587, %v1713
    %v1746 = vadd.f32 %v1588, %v1714
    %v1747 = vadd.f32 %v1589, %v1715
    %v1748 = vadd.f32 %v1590, %v1716
    %v1749 = vadd.f32 %v1591, %v1717
    %v1750 = vadd.f32 %v1592, %v1718
    %v1751 = vadd.f32 %v1593, %v1719
    %v1752 = vadd.f32 %v1594, %v1720
    %v1753 = vadd.f32 %v1595, %v1721
    %v1754 = vadd.f32 %v1596, %v1722
    %v1755 = vadd.f32 %v1597, %v1723
    %v1756 = vadd.f32 %v1598, %v1724
    %v1757 = vadd.f32 %v1599, %v1725
    %v1758 = vadd.f32 %v1600, %v1726
    %v1759 = vadd.f32 %v1601, %v1727
    %v1760 = vadd.f32 %v1602, %v1728
    %v1761 = vadd.f32 %v1603, %v1729
    %v1762 = vadd.f32 %v1604, %v1730
    %v1763 = vmul.f32 %v1669, %v736
    %v1764 = vmul.f32 %v1670, %v736
    %v1765 = vmul.f32 %v1671, %v736
    %v1766 = vmul.f32 %v1672, %v736
    %v1767 = vmul.f32 %v1673, %v736
    %v1768 = vmul.f32 %v1674, %v736
    %v1769 = vmul.f32 %v1675, %v736
    %v1770 = vmul.f32 %v1676, %v736
    %v1771 = vmul.f32 %v1677, %v736
    %v1772 = vmul.f32 %v1678, %v736
    %v1773 = vmul.f32 %v1679, %v736
    %v1774 = vmul.f32 %v1680, %v736
    %v1775 = vmul.f32 %v1681, %v736
    %v1776 = vmul.f32 %v1682, %v736
    %v1777 = vmul.f32 %v1683, %v736
    %v1778 = vmul.f32 %v1684, %v736
    %v1779 = vmul.f32 %v1685, %v736
    %v1780 = vmul.f32 %v1686, %v736
    %v1781 = vmul.f32 %v1687, %v736
    %v1782 = vmul.f32 %v1688, %v736
    %v1783 = vmul.f32 %v1689, %v736
    %v1784 = vmul.f32 %v1690, %v736
    %v1785 = vmul.f32 %v1691, %v736
    %v1786 = vmul.f32 %v1692, %v736
    %v1787 = vmul.f32 %v1693, %v736
    %v1788 = vmul.f32 %v1694, %v736
    %v1789 = vmul.f32 %v1695, %v736
    %v1790 = vmul.f32 %v1696, %v736
    %v1791 = vmul.f32 %v1697, %v736
    %v1792 = vmul.f32 %v1698, %v736
    %v1793 = vmul.f32 %v1699, %v736
    %v1794 = vmul.f32 %v1700, %v736
    %v1795 = vadd.f32 %v1731, %v1763
    %v1796 = vadd.f32 %v1732, %v1764
    %v1797 = vadd.f32 %v1733, %v1765
    %v1798 = vadd.f32 %v1734, %v1766
    %v1799 = vadd.f32 %v1735, %v1767
    %v1800 = vadd.f32 %v1736, %v1768
    %v1801 = vadd.f32 %v1737, %v1769
    %v1802 = vadd.f32 %v1738, %v1770
    %v1803 = vadd.f32 %v1739, %v1771
    %v1804 = vadd.f32 %v1740, %v1772
    %v1805 = vadd.f32 %v1741, %v1773
    %v1806 = vadd.f32 %v1742, %v1774
    %v1807 = vadd.f32 %v1743, %v1775
    %v1808 = vadd.f32 %v1744, %v1776
    %v1809 = vadd.f32 %v1745, %v1777
    %v1810 = vadd.f32 %v1746, %v1778
    %v1811 = vadd.f32 %v1747, %v1779
    %v1812 = vadd.f32 %v1748, %v1780
    %v1813 = vadd.f32 %v1749, %v1781
    %v1814 = vadd.f32 %v1750, %v1782
    %v1815 = vadd.f32 %v1751, %v1783
    %v1816 = vadd.f32 %v1752, %v1784
    %v1817 = vadd.f32 %v1753, %v1785
    %v1818 = vadd.f32 %v1754, %v1786
    %v1819 = vadd.f32 %v1755, %v1787
    %v1820 = vadd.f32 %v1756, %v1788
    %v1821 = vadd.f32 %v1757, %v1789
    %v1822 = vadd.f32 %v1758, %v1790
    %v1823 = vadd.f32 %v1759, %v1791
    %v1824 = vadd.f32 %v1760, %v1792
    %v1825 = vadd.f32 %v1761, %v1793
    %v1826 = vadd.f32 %v1762, %v1794
    %v1827 = vmul.f32 %v1671, %v804
    %v1828 = vmul.f32 %v1672, %v804
    %v1829 = vmul.f32 %v1673, %v804
    %v1830 = vmul.f32 %v1674, %v804
    %v1831 = vmul.f32 %v1675, %v804
    %v1832 = vmul.f32 %v1676, %v804
    %v1833 = vmul.f32 %v1677, %v804
    %v1834 = vmul.f32 %v1678, %v804
    %v1835 = vmul.f32 %v1679, %v804
    %v1836 = vmul.f32 %v1680, %v804
    %v1837 = vmul.f32 %v1681, %v804
    %v1838 = vmul.f32 %v1682, %v804
    %v1839 = vmul.f32 %v1683, %v804
    %v1840 = vmul.f32 %v1684, %v804
    %v1841 = vmul.f32 %v1685, %v804
    %v1842 = vmul.f32 %v1686, %v804
    %v1843 = vmul.f32 %v1687, %v804
    %v1844 = vmul.f32 %v1688, %v804
    %v1845 = vmul.f32 %v1689, %v804
    %v1846 = vmul.f32 %v1690, %v804
    %v1847 = vmul.f32 %v1691, %v804
    %v1848 = vmul.f32 %v1692, %v804
    %v1849 = vmul.f32 %v1693, %v804
    %v1850 = vmul.f32 %v1694, %v804
    %v1851 = vmul.f32 %v1695, %v804
    %v1852 = vmul.f32 %v1696, %v804
    %v1853 = vmul.f32 %v1697, %v804
    %v1854 = vmul.f32 %v1698, %v804
    %v1855 = vmul.f32 %v1699, %v804
    %v1856 = vmul.f32 %v1700, %v804
    %v1857 = vadd.f32 %v1795, %v1827
    %v1858 = vadd.f32 %v1796, %v1828
    %v1859 = vadd.f32 %v1797, %v1829
    %v1860 = vadd.f32 %v1798, %v1830
    %v1861 = vadd.f32 %v1799, %v1831
    %v1862 = vadd.f32 %v1800, %v1832
    %v1863 = vadd.f32 %v1801, %v1833
    %v1864 = vadd.f32 %v1802, %v1834
    %v1865 = vadd.f32 %v1803, %v1835
    %v1866 = vadd.f32 %v1804, %v1836
    %v1867 = vadd.f32 %v1805, %v1837
    %v1868 = vadd.f32 %v1806, %v1838
    %v1869 = vadd.f32 %v1807, %v1839
    %v1870 = vadd.f32 %v1808, %v1840
    %v1871 = vadd.f32 %v1809, %v1841
    %v1872 = vadd.f32 %v1810, %v1842
    %v1873 = vadd.f32 %v1811, %v1843
    %v1874 = vadd.f32 %v1812, %v1844
    %v1875 = vadd.f32 %v1813, %v1845
    %v1876 = vadd.f32 %v1814, %v1846
    %v1877 = vadd.f32 %v1815, %v1847
    %v1878 = vadd.f32 %v1816, %v1848
    %v1879 = vadd.f32 %v1817, %v1849
    %v1880 = vadd.f32 %v1818, %v1850
    %v1881 = vadd.f32 %v1819, %v1851
    %v1882 = vadd.f32 %v1820, %v1852
    %v1883 = vadd.f32 %v1821, %v1853
    %v1884 = vadd.f32 %v1822, %v1854
    %v1885 = vadd.f32 %v1823, %v1855
    %v1886 = vadd.f32 %v1824, %v1856
    %v1887 = vadd.f32 %v1825, %v835
    %v1888 = vadd.f32 %v1826, %v836
    %v1889 = vsel %vm869, %v1857, 0.0
    %v1890 = vsel %vm869, %v1859, 0.0
    %v1891 = vadd.f32 %v1889, %v1890
    %v1892 = vsel %vm869, %v1861, 0.0
    %v1893 = vadd.f32 %v1891, %v1892
    %v1894 = vsel %vm869, %v1863, 0.0
    %v1895 = vadd.f32 %v1893, %v1894
    %v1896 = vsel %vm869, %v1858, 0.0
    %v1897 = vsel %vm869, %v1860, 0.0
    %v1898 = vadd.f32 %v1896, %v1897
    %v1899 = vsel %vm869, %v1862, 0.0
    %v1900 = vadd.f32 %v1898, %v1899
    %v1901 = vsel %vm869, %v1864, 0.0
    %v1902 = vadd.f32 %v1900, %v1901
    %v1903 = vsel %vm869, %v1865, 0.0
    %v1904 = vsel %vm869, %v1867, 0.0
    %v1905 = vadd.f32 %v1903, %v1904
    %v1906 = vsel %vm869, %v1869, 0.0
    %v1907 = vadd.f32 %v1905, %v1906
    %v1908 = vsel %vm869, %v1871, 0.0
    %v1909 = vadd.f32 %v1907, %v1908
    %v1910 = vsel %vm869, %v1866, 0.0
    %v1911 = vsel %vm869, %v1868, 0.0
    %v1912 = vadd.f32 %v1910, %v1911
    %v1913 = vsel %vm869, %v1870, 0.0
    %v1914 = vadd.f32 %v1912, %v1913
    %v1915 = vsel %vm869, %v1872, 0.0
    %v1916 = vadd.f32 %v1914, %v1915
    %v1917 = vsel %vm869, %v1873, 0.0
    %v1918 = vsel %vm869, %v1875, 0.0
    %v1919 = vadd.f32 %v1917, %v1918
    %v1920 = vsel %vm869, %v1877, 0.0
    %v1921 = vadd.f32 %v1919, %v1920
    %v1922 = vsel %vm869, %v1879, 0.0
    %v1923 = vadd.f32 %v1921, %v1922
    %v1924 = vsel %vm869, %v1874, 0.0
    %v1925 = vsel %vm869, %v1876, 0.0
    %v1926 = vadd.f32 %v1924, %v1925
    %v1927 = vsel %vm869, %v1878, 0.0
    %v1928 = vadd.f32 %v1926, %v1927
    %v1929 = vsel %vm869, %v1880, 0.0
    %v1930 = vadd.f32 %v1928, %v1929
    %v1931 = vsel %vm869, %v1881, 0.0
    %v1932 = vsel %vm869, %v1883, 0.0
    %v1933 = vadd.f32 %v1931, %v1932
    %v1934 = vsel %vm869, %v1885, 0.0
    %v1935 = vadd.f32 %v1933, %v1934
    %v1936 = vsel %vm869, %v1887, 0.0
    %v1937 = vadd.f32 %v1935, %v1936
    %v1938 = vsel %vm869, %v1882, 0.0
    %v1939 = vsel %vm869, %v1884, 0.0
    %v1940 = vadd.f32 %v1938, %v1939
    %v1941 = vsel %vm869, %v1886, 0.0
    %v1942 = vadd.f32 %v1940, %v1941
    %v1943 = vsel %vm869, %v1888, 0.0
    %v1944 = vadd.f32 %v1942, %v1943
    %v1945 = vsel %vm926, %v1895, 0.0
    %v1946 = vrot.slane %v1945, 4
    %v1947 = vadd.f32 %v1945, %v1946
    %v1948 = vrot.slane %v1947, 2
    %v1949 = vadd.f32 %v1947, %v1948
    %v1950 = vrot.slane %v1949, 1
    %v1951 = vadd.f32 %v1949, %v1950
    %v1952 = vsel %vm926, %v1909, 0.0
    %v1953 = vrot.slane %v1952, 4
    %v1954 = vadd.f32 %v1952, %v1953
    %v1955 = vrot.slane %v1954, 2
    %v1956 = vadd.f32 %v1954, %v1955
    %v1957 = vrot.slane %v1956, 1
    %v1958 = vadd.f32 %v1956, %v1957
    %v1959 = vsel %vm926, %v1923, 0.0
    %v1960 = vrot.slane %v1959, 4
    %v1961 = vadd.f32 %v1959, %v1960
    %v1962 = vrot.slane %v1961, 2
    %v1963 = vadd.f32 %v1961, %v1962
    %v1964 = vrot.slane %v1963, 1
    %v1965 = vadd.f32 %v1963, %v1964
    %v1966 = vsel %vm926, %v1937, 0.0
    %v1967 = vrot.slane %v1966, 4
    %v1968 = vadd.f32 %v1966, %v1967
    %v1969 = vrot.slane %v1968, 2
    %v1970 = vadd.f32 %v1968, %v1969
    %v1971 = vrot.slane %v1970, 1
    %v1972 = vadd.f32 %v1970, %v1971
    %v1977 = vrot.slane %v1895, 4
    %v1978 = vrot.slane %v1909, 4
    %v1979 = vrot.slane %v1923, 4
    %v1980 = vrot.slane %v1937, 4
    %v1985 = vsel %vm926, %v1977, 0.0
    %v1986 = vrot.slane %v1985, 4
    %v1987 = vadd.f32 %v1985, %v1986
    %v1988 = vrot.slane %v1987, 2
    %v1989 = vadd.f32 %v1987, %v1988
    %v1990 = vrot.slane %v1989, 1
    %v1991 = vadd.f32 %v1989, %v1990
    %v1992 = vsel %vm926, %v1978, 0.0
    %v1993 = vrot.slane %v1992, 4
    %v1994 = vadd.f32 %v1992, %v1993
    %v1995 = vrot.slane %v1994, 2
    %v1996 = vadd.f32 %v1994, %v1995
    %v1997 = vrot.slane %v1996, 1
    %v1998 = vadd.f32 %v1996, %v1997
    %v1999 = vsel %vm926, %v1979, 0.0
    %v2000 = vrot.slane %v1999, 4
    %v2001 = vadd.f32 %v1999, %v2000
    %v2002 = vrot.slane %v2001, 2
    %v2003 = vadd.f32 %v2001, %v2002
    %v2004 = vrot.slane %v2003, 1
    %v2005 = vadd.f32 %v2003, %v2004
    %v2006 = vsel %vm926, %v1980, 0.0
    %v2007 = vrot.slane %v2006, 4
    %v2008 = vadd.f32 %v2006, %v2007
    %v2009 = vrot.slane %v2008, 2
    %v2010 = vadd.f32 %v2008, %v2009
    %v2011 = vrot.slane %v2010, 1
    %v2012 = vadd.f32 %v2010, %v2011
    %v2013 = vsel %vm926, %v1902, 0.0
    %v2014 = vrot.slane %v2013, 4
    %v2015 = vadd.f32 %v2013, %v2014
    %v2016 = vrot.slane %v2015, 2
    %v2017 = vadd.f32 %v2015, %v2016
    %v2018 = vrot.slane %v2017, 1
    %v2019 = vadd.f32 %v2017, %v2018
    %v2020 = vsel %vm926, %v1916, 0.0
    %v2021 = vrot.slane %v2020, 4
    %v2022 = vadd.f32 %v2020, %v2021
    %v2023 = vrot.slane %v2022, 2
    %v2024 = vadd.f32 %v2022, %v2023
    %v2025 = vrot.slane %v2024, 1
    %v2026 = vadd.f32 %v2024, %v2025
    %v2027 = vsel %vm926, %v1930, 0.0
    %v2028 = vrot.slane %v2027, 4
    %v2029 = vadd.f32 %v2027, %v2028
    %v2030 = vrot.slane %v2029, 2
    %v2031 = vadd.f32 %v2029, %v2030
    %v2032 = vrot.slane %v2031, 1
    %v2033 = vadd.f32 %v2031, %v2032
    %v2034 = vsel %vm926, %v1944, 0.0
    %v2035 = vrot.slane %v2034, 4
    %v2036 = vadd.f32 %v2034, %v2035
    %v2037 = vrot.slane %v2036, 2
    %v2038 = vadd.f32 %v2036, %v2037
    %v2039 = vrot.slane %v2038, 1
    %v2040 = vadd.f32 %v2038, %v2039
    %v2045 = vrot.slane %v1902, 4
    %v2046 = vrot.slane %v1916, 4
    %v2047 = vrot.slane %v1930, 4
    %v2048 = vrot.slane %v1944, 4
    %v2053 = vsel %vm926, %v2045, 0.0
    %v2054 = vrot.slane %v2053, 4
    %v2055 = vadd.f32 %v2053, %v2054
    %v2056 = vrot.slane %v2055, 2
    %v2057 = vadd.f32 %v2055, %v2056
    %v2058 = vrot.slane %v2057, 1
    %v2059 = vadd.f32 %v2057, %v2058
    %v2060 = vsel %vm926, %v2046, 0.0
    %v2061 = vrot.slane %v2060, 4
    %v2062 = vadd.f32 %v2060, %v2061
    %v2063 = vrot.slane %v2062, 2
    %v2064 = vadd.f32 %v2062, %v2063
    %v2065 = vrot.slane %v2064, 1
    %v2066 = vadd.f32 %v2064, %v2065
    %v2067 = vsel %vm926, %v2047, 0.0
    %v2068 = vrot.slane %v2067, 4
    %v2069 = vadd.f32 %v2067, %v2068
    %v2070 = vrot.slane %v2069, 2
    %v2071 = vadd.f32 %v2069, %v2070
    %v2072 = vrot.slane %v2071, 1
    %v2073 = vadd.f32 %v2071, %v2072
    %v2074 = vsel %vm926, %v2048, 0.0
    %v2075 = vrot.slane %v2074, 4
    %v2076 = vadd.f32 %v2074, %v2075
    %v2077 = vrot.slane %v2076, 2
    %v2078 = vadd.f32 %v2076, %v2077
    %v2079 = vrot.slane %v2078, 1
    %v2080 = vadd.f32 %v2078, %v2079
    %v2081 = vsel %vm1063, %v1951, %v1991
    %v2082 = vsel %vm1063, %v1958, %v1998
    %v2083 = vsel %vm1063, %v1965, %v2005
    %v2084 = vsel %vm1063, %v1972, %v2012
    %v2085 = vsel %vm1068, %v2081, %v2019
    %v2086 = vsel %vm1068, %v2082, %v2026
    %v2087 = vsel %vm1068, %v2083, %v2033
    %v2088 = vsel %vm1068, %v2084, %v2040
    %v2089 = vsel %vm1073, %v2085, %v2059
    %v2090 = vsel %vm1073, %v2086, %v2066
    %v2091 = vsel %vm1073, %v2087, %v2073
    %v2092 = vsel %vm1073, %v2088, %v2080
    %v2093 = vmul.f32 %v2089, 0.0625
    %v2094 = vmul.f32 %v2090, 0.0625
    %v2095 = vmul.f32 %v2091, 0.0625
    %v2096 = vmul.f32 %v2092, 0.0625
    %v2097 = vadd.f32 %v2093, %v1086
    %v2098 = vadd.f32 %v2094, %v1086
    %v2099 = vadd.f32 %v2095, %v1086
    %v2100 = vadd.f32 %v2096, %v1086
    %s2101 = scalar_lea.vmem [#allocation2], 16
    %2102 = vst.msk [vmem:[%s2101] sm:$0xf] %vm926, %v2097
    %2103 = vst.msk [vmem:[%s2101 + $0x4] sm:$0xf] %vm926, %v2098
    %2104 = vst.msk [vmem:[%s2101 + $0x8] sm:$0xf] %vm926, %v2099
    %2105 = vst.msk [vmem:[%s2101 + $0xc] sm:$0xf] %vm926, %v2100
    // Predicated region
    $region14: #{tpu_custom_call.1} parent=1 // pred_check
      _
    $region15: #{tpu_custom_call.1} parent=1 // pred_check_branch
      %2107 = sbr.rel (0) target = $region17
    $region16: #{tpu_custom_call.1} parent=1 // pred_region
      %s2109 = ssub.s32 512, 512
      %2110 = vsyncadd [#allocation3], %s2109
      %s2111 = sshll.u32 [#allocation2], 4
      %s2112 = int_to_ptr.vmem [resolvable:$true] %s2111
      %2117 = dma.vmem_to_hbm [thread:$0]  %s2112, 512, %s3, [#allocation3], 64, 64, 4
    $region17: #{tpu_custom_call.1} parent=1 // pred_fallthru
      _
    // Predicated region
    $region18: #{tpu_custom_call.1} parent=1 // pred_check
      _
    $region19: #{tpu_custom_call.1} parent=1 // pred_check_branch
      %2119 = sbr.rel (0) target = $region21
    $region20: #{tpu_custom_call.1} parent=1 // pred_region
      %2120 = dma.done [#allocation3], 512
    $region21: #{tpu_custom_call.1} parent=1 // pred_fallthru
      _
    %2121 = vsyncpa [#allocation3], 1

</llo_original>
